<compile_context>
chip_gen: v5e
topology: v5e:2x2
jax: 0.10.0
libtpu: 0.0.40
codegen_flags: <defaults>
</compile_context>

<pallas_src>
from functools import partial

import jax
import jax.numpy as jnp
from jax.experimental import pallas as pl
from jax.experimental.pallas import tpu as pltpu


# ---------------- Single fused kernel: prep + avg-embed + bi-LSTM + head ----------------
def avg_bilstm_head_kernel(convs_ref, w_cnt_ref, w_tin_ref, bias_ref, w_hh_ref,
                           h0_ref, c0_ref, w_out_ref, b_out_ref, out_ref,
                           *, T, Bp):
    N, L = convs_ref.shape                      # N == T*Bp, time-major rows (t*Bp + b)
    Lw = L - 3
    V, G = w_cnt_ref.shape                      # G = 8*Hd (128 for Hd=16)
    Gq = G // 4                                 # one gate group = 2*Hd lanes
    Hd = Gq // 2

    # ---- in-kernel prep: tinfo / word-id split (static lane slices) ----
    convs = convs_ref[...]                      # [N, L] int32
    tinfo = convs[:, :3].astype(jnp.float32)    # [N, 3]
    ids = convs[:, 3:]                          # [N, Lw] int32

    # ---- avg-embed folded into the input projection: one-hot counts @ (emb @ W_ih) ----
    # w_cnt row 0 is zero (padding_idx=0), so padded words contribute nothing.
    iota_v = jax.lax.broadcasted_iota(jnp.int32, (N, Lw, V), 2)
    counts = jnp.sum((ids[:, :, None] == iota_v).astype(jnp.float32),
                     axis=1) * (1.0 / Lw)                                       # [N, V]
    g_all = (jnp.dot(counts, w_cnt_ref[...], preferred_element_type=jnp.float32)
             + jnp.dot(tinfo, w_tin_ref[...], preferred_element_type=jnp.float32)
             + bias_ref[...])                                                   # [N, G]

    # ---- static lane masks (fused layout: gate groups [f | i | o | g], each [fwd|bwd]) ----
    lane_g = jax.lax.broadcasted_iota(jnp.int32, (Bp, G), 1)
    fwd_cols = (lane_g % Gq) < Hd               # fwd-direction columns of every gate group
    g_lanes = lane_g >= 3 * Gq                  # tanh-activated cell-input gate group
    lane_h = jax.lax.broadcasted_iota(jnp.int32, (Bp, Gq), 1)
    fwd_half = lane_h < Hd                      # fwd half of the [Bp, 2*Hd] carry

    # ---- per-timestep validity: turn t is valid while no turn <= t has word0 == 0 ----
    nz = (convs[:, 3:4] != 0).astype(jnp.float32)                               # [N, 1]
    alive = []
    run = jnp.ones((Bp, 1), jnp.float32)
    for t in range(T):
        run = run * nz[t * Bp:(t + 1) * Bp]
        alive.append(run)

    # ---- hoisted, vreg-aligned per-step operands (independent of the recurrence carry) ----
    gin, keep = [], []
    for t in range(T):
        rt = T - 1 - t                          # backward direction's timestep
        gin.append(jnp.where(fwd_cols,
                             g_all[t * Bp:(t + 1) * Bp],
                             g_all[rt * Bp:(rt + 1) * Bp]))                     # [Bp, G]
        keep.append(jnp.where(fwd_half, alive[t], alive[rt]) > 0.0)             # [Bp, 2Hd]

    # ---- serial bi-directional recurrence (statically unrolled, T is tiny) ----
    whh = w_hh_ref[...]                         # [2*Hd, G]
    h = h0_ref[...]                             # [Bp, 2*Hd] = [fwd | bwd]
    c = c0_ref[...]
    for t in range(T):
        gates = gin[t] + jnp.dot(h, whh, preferred_element_type=jnp.float32)    # [Bp, G]
        act = jnp.where(g_lanes, jnp.tanh(gates), jax.nn.sigmoid(gates))        # [f|i|o|g]
        rot = pltpu.roll(act, shift=2 * Gq, axis=1)                             # [o|g|f|i]
        prod = act * rot                        # [f*o | i*g | o*f | g*i]
        ig = prod[:, Gq:2 * Gq]                 # sigmoid(i) * tanh(g)
        c_new = act[:, :Gq] * c + ig            # f*c + i*g
        h_new = rot[:, :Gq] * jnp.tanh(c_new)   # o * tanh(c_new)
        h = jnp.where(keep[t], h_new, h)
        c = jnp.where(keep[t], c_new, c)

    # ---- hidden2label + Sigmoid (h is already [h_fwd | h_bwd]) ----
    out_ref[...] = jax.nn.sigmoid(
        jnp.dot(h, w_out_ref[...], preferred_element_type=jnp.float32) + b_out_ref[...])


# ---------------- Parameter init (deterministic) + weight fusion ----------------
def init_params(key, vocab_num, embedding_dim, hidden_dim, batch_size):
    Hd = hidden_dim // 2                        # bi_direction=True
    Din = hidden_dim + 3                        # (module assumes embedding_dim == hidden_dim)
    E = embedding_dim
    ks = jax.random.split(key, 13)
    s = 0.1

    emb = jax.random.normal(ks[0], (vocab_num, E), jnp.float32) * s
    emb = emb.at[0].set(0.0)                    # padding_idx=0

    raw = {}
    for i, d in enumerate("fb"):                # torch layout, gate order (i, f, g, o)
        raw[f"w_ih_{d}"] = jax.random.normal(ks[1 + 4 * i], (4 * Hd, Din), jnp.float32) * s
        raw[f"w_hh_{d}"] = jax.random.normal(ks[2 + 4 * i], (4 * Hd, Hd), jnp.float32) * s
        raw[f"b_ih_{d}"] = jax.random.normal(ks[3 + 4 * i], (4 * Hd,), jnp.float32) * s
        raw[f"b_hh_{d}"] = jax.random.normal(ks[4 + 4 * i], (4 * Hd,), jnp.float32) * s

    w_out = jax.random.normal(ks[9], (hidden_dim, 1), jnp.float32) * s
    b_out = jax.random.normal(ks[10], (1, 1), jnp.float32) * s
    h0 = jax.random.normal(ks[11], (2, batch_size, Hd), jnp.float32)   # [fwd, bwd]
    c0 = jax.random.normal(ks[12], (2, batch_size, Hd), jnp.float32)

    # Fuse fwd/bwd LSTM weights into the gate-major 8*Hd-lane layout the kernel
    # uses: gate-group order [f | i | o | g], each group = [fwd(Hd) | bwd(Hd)].
    G = 8 * Hd
    GATE_POS = {0: 1, 1: 0, 2: 3, 3: 2}         # torch gate k (i,f,g,o) -> fused group
    w_emb_gm = jnp.zeros((E, G), jnp.float32)   # rows: mean-embedding inputs
    w_tin = jnp.zeros((3, G), jnp.float32)      # rows: turn-info inputs
    w_hh = jnp.zeros((2 * Hd, G), jnp.float32)  # rows: [h_fwd | h_bwd]
    bias = jnp.zeros((1, G), jnp.float32)       # b_ih + b_hh, fused columns
    for di, d in enumerate("fb"):
        wih = raw[f"w_ih_{d}"]
        whh_d = raw[f"w_hh_{d}"]
        b_d = raw[f"b_ih_{d}"] + raw[f"b_hh_{d}"]
        for k in range(4):                      # torch gate order i, f, g, o
            col0 = GATE_POS[k] * 2 * Hd + di * Hd
            col1 = col0 + Hd
            w_emb_gm = w_emb_gm.at[:, col0:col1].set(wih[k * Hd:(k + 1) * Hd, :E].T)
            w_tin = w_tin.at[:, col0:col1].set(wih[k * Hd:(k + 1) * Hd, E:].T)
            w_hh = w_hh.at[di * Hd:(di + 1) * Hd, col0:col1].set(
                whh_d[k * Hd:(k + 1) * Hd, :].T)
            bias = bias.at[0, col0:col1].set(b_d[k * Hd:(k + 1) * Hd])

    # Fold the embedding table into the input projection (removes one MXU matmul,
    # the [N,E] intermediate and the emb table from the per-forward kernel).
    w_cnt = jnp.dot(emb, w_emb_gm)              # [V, G]; 1/Lw mean-scale applied in-kernel

    # Sublane-pad batch to a multiple of 8 so per-step row slices are vreg-aligned.
    Bp = ((batch_size + 7) // 8) * 8
    h0f = jnp.zeros((Bp, 2 * Hd), jnp.float32).at[:batch_size].set(
        jnp.concatenate([h0[0], h0[1]], axis=1))          # [Bp, 2*Hd] = [fwd | bwd]
    c0f = jnp.zeros((Bp, 2 * Hd), jnp.float32).at[:batch_size].set(
        jnp.concatenate([c0[0], c0[1]], axis=1))

    return {"w_cnt": w_cnt, "w_tin": w_tin, "w_hh": w_hh, "bias": bias,
            "w_out": w_out, "b_out": b_out, "h0": h0f, "c0": c0f}


# ---------------- Full forward pass (one pallas_call) ----------------
def avg_forward(convs, params):
    B, T, L = convs.shape
    Bp = params["h0"].shape[0]                  # batch padded to a sublane multiple at init

    # Single tiny wrapper fusion: pad batch to Bp, go time-major, flatten rows to
    # t*Bp + b.  All other prep (ids/tinfo split, turn_num/mask) happens in-kernel.
    convs_p = jnp.zeros((Bp, T, L), jnp.int32).at[:B].set(convs.astype(jnp.int32))
    convs_tm = jnp.transpose(convs_p, (1, 0, 2)).reshape(T * Bp, L)

    kernel = partial(avg_bilstm_head_kernel, T=T, Bp=Bp)
    vmem = lambda: pl.BlockSpec(memory_space=pltpu.MemorySpace.VMEM)
    out = pl.pallas_call(
        kernel,
        out_shape=jax.ShapeDtypeStruct((Bp, 1), jnp.float32),
        in_specs=[vmem() for _ in range(9)],
        out_specs=vmem(),
    )(convs_tm, params["w_cnt"], params["w_tin"], params["bias"], params["w_hh"],
      params["h0"], params["c0"], params["w_out"], params["b_out"])
    return out[:B, 0]                           # sigmoid(logits).view(-1)


if __name__ == "__main__":
    V, E, H, B = 64, 32, 32, 2                  # vocab, emb_dim, hidden_dim, batch
    T, Lw = 6, 8                                # max turns, words per turn
    L = 3 + Lw

    key = jax.random.PRNGKey(0)
    kp, kw, kt = jax.random.split(key, 3)
    params = init_params(kp, V, E, H, B)

    words = jax.random.randint(kw, (B, T, Lw), 1, V, dtype=jnp.int32)
    words = words.at[0, 4:, :].set(0)           # conv 0 has only 4 valid turns
    words = words.at[0, 1, 5:].set(0)           # in-sentence padding
    words = words.at[1, 3, 6:].set(0)
    tinfo = jax.random.randint(kt, (B, T, 3), 0, 3, dtype=jnp.int32)
    convs = jnp.concatenate([tinfo, words], axis=2)   # [B, T, L] int32

    out = jax.jit(avg_forward)(convs, params)
    out = jax.block_until_ready(out)
    assert out.shape == (B,)
    assert bool(jnp.all(jnp.isfinite(out)))
    print("KERNEL_OK")
</pallas_src>

<mosaic_0001>
module attributes {stable_mosaic.version = 11 : i64} {
  func.func @avg_bilstm_head_kernel(%arg0: memref<48x11xi32, #tpu.memory_space<vmem>>, %arg1: memref<64x128xf32, #tpu.memory_space<vmem>>, %arg2: memref<3x128xf32, #tpu.memory_space<vmem>>, %arg3: memref<1x128xf32, #tpu.memory_space<vmem>>, %arg4: memref<32x128xf32, #tpu.memory_space<vmem>>, %arg5: memref<8x32xf32, #tpu.memory_space<vmem>>, %arg6: memref<8x32xf32, #tpu.memory_space<vmem>>, %arg7: memref<32x1xf32, #tpu.memory_space<vmem>>, %arg8: memref<1x1xf32, #tpu.memory_space<vmem>>, %arg9: memref<8x1xf32, #tpu.memory_space<vmem>>) attributes {dimension_semantics = [], scalar_prefetch = 0 : i64, scratch_operands = 0 : i64, tpu.core_type = #tpu.core_type<tc>} {
    %c0 = arith.constant 0 : index
    %c0_0 = arith.constant 0 : index
    %0 = vector.load %arg0[%c0, %c0_0] : memref<48x11xi32, #tpu.memory_space<vmem>>, vector<48x11xi32>
    %1 = vector.extract_strided_slice %0 {offsets = [0, 0], sizes = [48, 3], strides = [1, 1]} : vector<48x11xi32> to vector<48x3xi32>
    %2 = arith.sitofp %1 : vector<48x3xi32> to vector<48x3xf32>
    %3 = vector.extract_strided_slice %0 {offsets = [0, 3], sizes = [48, 8], strides = [1, 1]} : vector<48x11xi32> to vector<48x8xi32>
    %4 = tpu.iota {dimensions = array<i32: 2>} : vector<48x8x64xi32>
    %5 = vector.shape_cast %3 : vector<48x8xi32> to vector<48x8x1xi32>
    %6 = vector.broadcast %5 : vector<48x8x1xi32> to vector<48x8x64xi32>
    %7 = arith.cmpi eq, %6, %4 : vector<48x8x64xi32>
    %8 = arith.extui %7 : vector<48x8x64xi1> to vector<48x8x64xi32>
    %9 = arith.sitofp %8 : vector<48x8x64xi32> to vector<48x8x64xf32>
    %cst = arith.constant dense<0.000000e+00> : vector<48x64xf32>
    %10 = vector.multi_reduction <add>, %9, %cst [1] : vector<48x8x64xf32> to vector<48x64xf32>
    %cst_1 = arith.constant 1.250000e-01 : f32
    %11 = vector.broadcast %cst_1 : f32 to vector<48x64xf32>
    %12 = arith.mulf %10, %11 : vector<48x64xf32>
    %c0_2 = arith.constant 0 : index
    %c0_3 = arith.constant 0 : index
    %13 = vector.load %arg1[%c0_2, %c0_3] : memref<64x128xf32, #tpu.memory_space<vmem>>, vector<64x128xf32>
    %cst_4 = arith.constant dense<0.000000e+00> : vector<48x128xf32>
    %14 = tpu.matmul %12, %13, %cst_4 {dimension_numbers = #tpu.dot_dimension_numbers<[1], [0], [0], [1], [0, 0, 1, 1], [], []>} : vector<48x64xf32>, vector<64x128xf32>, vector<48x128xf32> -> vector<48x128xf32>
    %c0_5 = arith.constant 0 : index
    %c0_6 = arith.constant 0 : index
    %15 = vector.load %arg2[%c0_5, %c0_6] : memref<3x128xf32, #tpu.memory_space<vmem>>, vector<3x128xf32>
    %cst_7 = arith.constant dense<0.000000e+00> : vector<48x128xf32>
    %16 = tpu.matmul %2, %15, %cst_7 {dimension_numbers = #tpu.dot_dimension_numbers<[1], [0], [0], [1], [0, 0, 1, 1], [], []>} : vector<48x3xf32>, vector<3x128xf32>, vector<48x128xf32> -> vector<48x128xf32>
    %17 = arith.addf %14, %16 : vector<48x128xf32>
    %c0_8 = arith.constant 0 : index
    %c0_9 = arith.constant 0 : index
    %18 = vector.load %arg3[%c0_8, %c0_9] : memref<1x128xf32, #tpu.memory_space<vmem>>, vector<1x128xf32>
    %19 = vector.broadcast %18 : vector<1x128xf32> to vector<48x128xf32>
    %20 = arith.addf %17, %19 : vector<48x128xf32>
    %21 = tpu.iota {dimensions = array<i32: 1>} : vector<8x128xi32>
    %c32_i32 = arith.constant 32 : i32
    %c0_i32 = arith.constant 0 : i32
    %22 = arith.cmpi eq, %c32_i32, %c0_i32 : i32
    %c1_i32 = arith.constant 1 : i32
    %23 = arith.select %22, %c1_i32, %c32_i32 : i32
    %24 = vector.broadcast %23 : i32 to vector<8x128xi32>
    %25 = arith.remsi %21, %24 : vector<8x128xi32>
    %c0_i32_10 = arith.constant 0 : i32
    %26 = vector.broadcast %c0_i32_10 : i32 to vector<8x128xi32>
    %27 = arith.cmpi ne, %25, %26 : vector<8x128xi32>
    %c0_i32_11 = arith.constant 0 : i32
    %28 = vector.broadcast %c0_i32_11 : i32 to vector<8x128xi32>
    %29 = arith.cmpi slt, %25, %28 : vector<8x128xi32>
    %c0_i32_12 = arith.constant 0 : i32
    %30 = arith.cmpi slt, %23, %c0_i32_12 : i32
    %31 = vector.broadcast %30 : i1 to vector<8x128xi1>
    %32 = vector.broadcast %31 : vector<8x128xi1> to vector<8x128xi1>
    %33 = arith.xori %29, %32 : vector<8x128xi1>
    %34 = arith.andi %33, %27 : vector<8x128xi1>
    %35 = vector.broadcast %23 : i32 to vector<8x128xi32>
    %36 = arith.addi %25, %35 : vector<8x128xi32>
    %37 = arith.select %34, %36, %25 : vector<8x128xi1>, vector<8x128xi32>
    %c16_i32 = arith.constant 16 : i32
    %38 = vector.broadcast %c16_i32 : i32 to vector<8x128xi32>
    %39 = arith.cmpi slt, %37, %38 : vector<8x128xi32>
    %c96_i32 = arith.constant 96 : i32
    %40 = vector.broadcast %c96_i32 : i32 to vector<8x128xi32>
    %41 = arith.cmpi sge, %21, %40 : vector<8x128xi32>
    %42 = tpu.iota {dimensions = array<i32: 1>} : vector<8x32xi32>
    %c16_i32_13 = arith.constant 16 : i32
    %43 = vector.broadcast %c16_i32_13 : i32 to vector<8x32xi32>
    %44 = arith.cmpi slt, %42, %43 : vector<8x32xi32>
    %45 = vector.extract_strided_slice %0 {offsets = [0, 3], sizes = [48, 1], strides = [1, 1]} : vector<48x11xi32> to vector<48x1xi32>
    %c0_i32_14 = arith.constant 0 : i32
    %46 = vector.broadcast %c0_i32_14 : i32 to vector<48x1xi32>
    %47 = arith.cmpi ne, %45, %46 : vector<48x1xi32>
    %48 = arith.extui %47 : vector<48x1xi1> to vector<48x1xi32>
    %49 = arith.sitofp %48 : vector<48x1xi32> to vector<48x1xf32>
    %cst_15 = arith.constant 1.000000e+00 : f32
    %50 = vector.broadcast %cst_15 : f32 to vector<8x1xf32>
    %51 = vector.extract_strided_slice %49 {offsets = [0, 0], sizes = [8, 1], strides = [1, 1]} : vector<48x1xf32> to vector<8x1xf32>
    %52 = arith.mulf %50, %51 : vector<8x1xf32>
    %53 = vector.extract_strided_slice %49 {offsets = [8, 0], sizes = [8, 1], strides = [1, 1]} : vector<48x1xf32> to vector<8x1xf32>
    %54 = arith.mulf %52, %53 : vector<8x1xf32>
    %55 = vector.extract_strided_slice %49 {offsets = [16, 0], sizes = [8, 1], strides = [1, 1]} : vector<48x1xf32> to vector<8x1xf32>
    %56 = arith.mulf %54, %55 : vector<8x1xf32>
    %57 = vector.extract_strided_slice %49 {offsets = [24, 0], sizes = [8, 1], strides = [1, 1]} : vector<48x1xf32> to vector<8x1xf32>
    %58 = arith.mulf %56, %57 : vector<8x1xf32>
    %59 = vector.extract_strided_slice %49 {offsets = [32, 0], sizes = [8, 1], strides = [1, 1]} : vector<48x1xf32> to vector<8x1xf32>
    %60 = arith.mulf %58, %59 : vector<8x1xf32>
    %61 = vector.extract_strided_slice %49 {offsets = [40, 0], sizes = [8, 1], strides = [1, 1]} : vector<48x1xf32> to vector<8x1xf32>
    %62 = arith.mulf %60, %61 : vector<8x1xf32>
    %63 = vector.extract_strided_slice %20 {offsets = [0, 0], sizes = [8, 128], strides = [1, 1]} : vector<48x128xf32> to vector<8x128xf32>
    %64 = vector.extract_strided_slice %20 {offsets = [40, 0], sizes = [8, 128], strides = [1, 1]} : vector<48x128xf32> to vector<8x128xf32>
    %65 = arith.select %39, %63, %64 : vector<8x128xi1>, vector<8x128xf32>
    %66 = vector.shape_cast %52 : vector<8x1xf32> to vector<8x1xf32>
    %67 = vector.broadcast %66 : vector<8x1xf32> to vector<8x32xf32>
    %68 = vector.shape_cast %62 : vector<8x1xf32> to vector<8x1xf32>
    %69 = vector.broadcast %68 : vector<8x1xf32> to vector<8x32xf32>
    %70 = arith.select %44, %67, %69 : vector<8x32xi1>, vector<8x32xf32>
    %cst_16 = arith.constant 0.000000e+00 : f32
    %71 = vector.broadcast %cst_16 : f32 to vector<8x32xf32>
    %72 = arith.cmpf ogt, %70, %71 : vector<8x32xf32>
    %73 = vector.extract_strided_slice %20 {offsets = [8, 0], sizes = [8, 128], strides = [1, 1]} : vector<48x128xf32> to vector<8x128xf32>
    %74 = vector.extract_strided_slice %20 {offsets = [32, 0], sizes = [8, 128], strides = [1, 1]} : vector<48x128xf32> to vector<8x128xf32>
    %75 = arith.select %39, %73, %74 : vector<8x128xi1>, vector<8x128xf32>
    %76 = vector.shape_cast %54 : vector<8x1xf32> to vector<8x1xf32>
    %77 = vector.broadcast %76 : vector<8x1xf32> to vector<8x32xf32>
    %78 = vector.shape_cast %60 : vector<8x1xf32> to vector<8x1xf32>
    %79 = vector.broadcast %78 : vector<8x1xf32> to vector<8x32xf32>
    %80 = arith.select %44, %77, %79 : vector<8x32xi1>, vector<8x32xf32>
    %cst_17 = arith.constant 0.000000e+00 : f32
    %81 = vector.broadcast %cst_17 : f32 to vector<8x32xf32>
    %82 = arith.cmpf ogt, %80, %81 : vector<8x32xf32>
    %83 = vector.extract_strided_slice %20 {offsets = [16, 0], sizes = [8, 128], strides = [1, 1]} : vector<48x128xf32> to vector<8x128xf32>
    %84 = vector.extract_strided_slice %20 {offsets = [24, 0], sizes = [8, 128], strides = [1, 1]} : vector<48x128xf32> to vector<8x128xf32>
    %85 = arith.select %39, %83, %84 : vector<8x128xi1>, vector<8x128xf32>
    %86 = vector.shape_cast %56 : vector<8x1xf32> to vector<8x1xf32>
    %87 = vector.broadcast %86 : vector<8x1xf32> to vector<8x32xf32>
    %88 = vector.shape_cast %58 : vector<8x1xf32> to vector<8x1xf32>
    %89 = vector.broadcast %88 : vector<8x1xf32> to vector<8x32xf32>
    %90 = arith.select %44, %87, %89 : vector<8x32xi1>, vector<8x32xf32>
    %cst_18 = arith.constant 0.000000e+00 : f32
    %91 = vector.broadcast %cst_18 : f32 to vector<8x32xf32>
    %92 = arith.cmpf ogt, %90, %91 : vector<8x32xf32>
    %93 = vector.extract_strided_slice %20 {offsets = [24, 0], sizes = [8, 128], strides = [1, 1]} : vector<48x128xf32> to vector<8x128xf32>
    %94 = vector.extract_strided_slice %20 {offsets = [16, 0], sizes = [8, 128], strides = [1, 1]} : vector<48x128xf32> to vector<8x128xf32>
    %95 = arith.select %39, %93, %94 : vector<8x128xi1>, vector<8x128xf32>
    %96 = vector.shape_cast %58 : vector<8x1xf32> to vector<8x1xf32>
    %97 = vector.broadcast %96 : vector<8x1xf32> to vector<8x32xf32>
    %98 = vector.shape_cast %56 : vector<8x1xf32> to vector<8x1xf32>
    %99 = vector.broadcast %98 : vector<8x1xf32> to vector<8x32xf32>
    %100 = arith.select %44, %97, %99 : vector<8x32xi1>, vector<8x32xf32>
    %cst_19 = arith.constant 0.000000e+00 : f32
    %101 = vector.broadcast %cst_19 : f32 to vector<8x32xf32>
    %102 = arith.cmpf ogt, %100, %101 : vector<8x32xf32>
    %103 = vector.extract_strided_slice %20 {offsets = [32, 0], sizes = [8, 128], strides = [1, 1]} : vector<48x128xf32> to vector<8x128xf32>
    %104 = vector.extract_strided_slice %20 {offsets = [8, 0], sizes = [8, 128], strides = [1, 1]} : vector<48x128xf32> to vector<8x128xf32>
    %105 = arith.select %39, %103, %104 : vector<8x128xi1>, vector<8x128xf32>
    %106 = vector.shape_cast %60 : vector<8x1xf32> to vector<8x1xf32>
    %107 = vector.broadcast %106 : vector<8x1xf32> to vector<8x32xf32>
    %108 = vector.shape_cast %54 : vector<8x1xf32> to vector<8x1xf32>
    %109 = vector.broadcast %108 : vector<8x1xf32> to vector<8x32xf32>
    %110 = arith.select %44, %107, %109 : vector<8x32xi1>, vector<8x32xf32>
    %cst_20 = arith.constant 0.000000e+00 : f32
    %111 = vector.broadcast %cst_20 : f32 to vector<8x32xf32>
    %112 = arith.cmpf ogt, %110, %111 : vector<8x32xf32>
    %113 = vector.extract_strided_slice %20 {offsets = [40, 0], sizes = [8, 128], strides = [1, 1]} : vector<48x128xf32> to vector<8x128xf32>
    %114 = vector.extract_strided_slice %20 {offsets = [0, 0], sizes = [8, 128], strides = [1, 1]} : vector<48x128xf32> to vector<8x128xf32>
    %115 = arith.select %39, %113, %114 : vector<8x128xi1>, vector<8x128xf32>
    %116 = vector.shape_cast %62 : vector<8x1xf32> to vector<8x1xf32>
    %117 = vector.broadcast %116 : vector<8x1xf32> to vector<8x32xf32>
    %118 = vector.shape_cast %52 : vector<8x1xf32> to vector<8x1xf32>
    %119 = vector.broadcast %118 : vector<8x1xf32> to vector<8x32xf32>
    %120 = arith.select %44, %117, %119 : vector<8x32xi1>, vector<8x32xf32>
    %cst_21 = arith.constant 0.000000e+00 : f32
    %121 = vector.broadcast %cst_21 : f32 to vector<8x32xf32>
    %122 = arith.cmpf ogt, %120, %121 : vector<8x32xf32>
    %c0_22 = arith.constant 0 : index
    %c0_23 = arith.constant 0 : index
    %123 = vector.load %arg4[%c0_22, %c0_23] : memref<32x128xf32, #tpu.memory_space<vmem>>, vector<32x128xf32>
    %c0_24 = arith.constant 0 : index
    %c0_25 = arith.constant 0 : index
    %124 = vector.load %arg5[%c0_24, %c0_25] : memref<8x32xf32, #tpu.memory_space<vmem>>, vector<8x32xf32>
    %c0_26 = arith.constant 0 : index
    %c0_27 = arith.constant 0 : index
    %125 = vector.load %arg6[%c0_26, %c0_27] : memref<8x32xf32, #tpu.memory_space<vmem>>, vector<8x32xf32>
    %cst_28 = arith.constant dense<0.000000e+00> : vector<8x128xf32>
    %126 = tpu.matmul %124, %123, %cst_28 {dimension_numbers = #tpu.dot_dimension_numbers<[1], [0], [0], [1], [0, 0, 1, 1], [], []>} : vector<8x32xf32>, vector<32x128xf32>, vector<8x128xf32> -> vector<8x128xf32>
    %127 = arith.addf %65, %126 : vector<8x128xf32>
    %128 = math.tanh %127 : vector<8x128xf32>
    %129 = arith.negf %127 : vector<8x128xf32>
    %130 = math.exp %129 : vector<8x128xf32>
    %cst_29 = arith.constant 1.000000e+00 : f32
    %131 = vector.broadcast %cst_29 : f32 to vector<8x128xf32>
    %132 = arith.addf %131, %130 : vector<8x128xf32>
    %133 = arith.divf %131, %132 : vector<8x128xf32>
    %134 = arith.select %41, %128, %133 : vector<8x128xi1>, vector<8x128xf32>
    %c64_i32 = arith.constant 64 : i32
    %135 = tpu.dynamic_rotate %134 by %c64_i32 dim 1 : vector<8x128xf32>, i32 -> vector<8x128xf32>
    %136 = arith.mulf %134, %135 : vector<8x128xf32>
    %137 = vector.extract_strided_slice %136 {offsets = [0, 32], sizes = [8, 32], strides = [1, 1]} : vector<8x128xf32> to vector<8x32xf32>
    %138 = vector.extract_strided_slice %134 {offsets = [0, 0], sizes = [8, 32], strides = [1, 1]} : vector<8x128xf32> to vector<8x32xf32>
    %139 = arith.mulf %138, %125 : vector<8x32xf32>
    %140 = arith.addf %139, %137 : vector<8x32xf32>
    %141 = vector.extract_strided_slice %135 {offsets = [0, 0], sizes = [8, 32], strides = [1, 1]} : vector<8x128xf32> to vector<8x32xf32>
    %142 = math.tanh %140 : vector<8x32xf32>
    %143 = arith.mulf %141, %142 : vector<8x32xf32>
    %144 = arith.select %72, %143, %124 : vector<8x32xi1>, vector<8x32xf32>
    %145 = arith.select %72, %140, %125 : vector<8x32xi1>, vector<8x32xf32>
    %cst_30 = arith.constant dense<0.000000e+00> : vector<8x128xf32>
    %146 = tpu.matmul %144, %123, %cst_30 {dimension_numbers = #tpu.dot_dimension_numbers<[1], [0], [0], [1], [0, 0, 1, 1], [], []>} : vector<8x32xf32>, vector<32x128xf32>, vector<8x128xf32> -> vector<8x128xf32>
    %147 = arith.addf %75, %146 : vector<8x128xf32>
    %148 = math.tanh %147 : vector<8x128xf32>
    %149 = arith.negf %147 : vector<8x128xf32>
    %150 = math.exp %149 : vector<8x128xf32>
    %cst_31 = arith.constant 1.000000e+00 : f32
    %151 = vector.broadcast %cst_31 : f32 to vector<8x128xf32>
    %152 = arith.addf %151, %150 : vector<8x128xf32>
    %153 = arith.divf %151, %152 : vector<8x128xf32>
    %154 = arith.select %41, %148, %153 : vector<8x128xi1>, vector<8x128xf32>
    %c64_i32_32 = arith.constant 64 : i32
    %155 = tpu.dynamic_rotate %154 by %c64_i32_32 dim 1 : vector<8x128xf32>, i32 -> vector<8x128xf32>
    %156 = arith.mulf %154, %155 : vector<8x128xf32>
    %157 = vector.extract_strided_slice %156 {offsets = [0, 32], sizes = [8, 32], strides = [1, 1]} : vector<8x128xf32> to vector<8x32xf32>
    %158 = vector.extract_strided_slice %154 {offsets = [0, 0], sizes = [8, 32], strides = [1, 1]} : vector<8x128xf32> to vector<8x32xf32>
    %159 = arith.mulf %158, %145 : vector<8x32xf32>
    %160 = arith.addf %159, %157 : vector<8x32xf32>
    %161 = vector.extract_strided_slice %155 {offsets = [0, 0], sizes = [8, 32], strides = [1, 1]} : vector<8x128xf32> to vector<8x32xf32>
    %162 = math.tanh %160 : vector<8x32xf32>
    %163 = arith.mulf %161, %162 : vector<8x32xf32>
    %164 = arith.select %82, %163, %144 : vector<8x32xi1>, vector<8x32xf32>
    %165 = arith.select %82, %160, %145 : vector<8x32xi1>, vector<8x32xf32>
    %cst_33 = arith.constant dense<0.000000e+00> : vector<8x128xf32>
    %166 = tpu.matmul %164, %123, %cst_33 {dimension_numbers = #tpu.dot_dimension_numbers<[1], [0], [0], [1], [0, 0, 1, 1], [], []>} : vector<8x32xf32>, vector<32x128xf32>, vector<8x128xf32> -> vector<8x128xf32>
    %167 = arith.addf %85, %166 : vector<8x128xf32>
    %168 = math.tanh %167 : vector<8x128xf32>
    %169 = arith.negf %167 : vector<8x128xf32>
    %170 = math.exp %169 : vector<8x128xf32>
    %cst_34 = arith.constant 1.000000e+00 : f32
    %171 = vector.broadcast %cst_34 : f32 to vector<8x128xf32>
    %172 = arith.addf %171, %170 : vector<8x128xf32>
    %173 = arith.divf %171, %172 : vector<8x128xf32>
    %174 = arith.select %41, %168, %173 : vector<8x128xi1>, vector<8x128xf32>
    %c64_i32_35 = arith.constant 64 : i32
    %175 = tpu.dynamic_rotate %174 by %c64_i32_35 dim 1 : vector<8x128xf32>, i32 -> vector<8x128xf32>
    %176 = arith.mulf %174, %175 : vector<8x128xf32>
    %177 = vector.extract_strided_slice %176 {offsets = [0, 32], sizes = [8, 32], strides = [1, 1]} : vector<8x128xf32> to vector<8x32xf32>
    %178 = vector.extract_strided_slice %174 {offsets = [0, 0], sizes = [8, 32], strides = [1, 1]} : vector<8x128xf32> to vector<8x32xf32>
    %179 = arith.mulf %178, %165 : vector<8x32xf32>
    %180 = arith.addf %179, %177 : vector<8x32xf32>
    %181 = vector.extract_strided_slice %175 {offsets = [0, 0], sizes = [8, 32], strides = [1, 1]} : vector<8x128xf32> to vector<8x32xf32>
    %182 = math.tanh %180 : vector<8x32xf32>
    %183 = arith.mulf %181, %182 : vector<8x32xf32>
    %184 = arith.select %92, %183, %164 : vector<8x32xi1>, vector<8x32xf32>
    %185 = arith.select %92, %180, %165 : vector<8x32xi1>, vector<8x32xf32>
    %cst_36 = arith.constant dense<0.000000e+00> : vector<8x128xf32>
    %186 = tpu.matmul %184, %123, %cst_36 {dimension_numbers = #tpu.dot_dimension_numbers<[1], [0], [0], [1], [0, 0, 1, 1], [], []>} : vector<8x32xf32>, vector<32x128xf32>, vector<8x128xf32> -> vector<8x128xf32>
    %187 = arith.addf %95, %186 : vector<8x128xf32>
    %188 = math.tanh %187 : vector<8x128xf32>
    %189 = arith.negf %187 : vector<8x128xf32>
    %190 = math.exp %189 : vector<8x128xf32>
    %cst_37 = arith.constant 1.000000e+00 : f32
    %191 = vector.broadcast %cst_37 : f32 to vector<8x128xf32>
    %192 = arith.addf %191, %190 : vector<8x128xf32>
    %193 = arith.divf %191, %192 : vector<8x128xf32>
    %194 = arith.select %41, %188, %193 : vector<8x128xi1>, vector<8x128xf32>
    %c64_i32_38 = arith.constant 64 : i32
    %195 = tpu.dynamic_rotate %194 by %c64_i32_38 dim 1 : vector<8x128xf32>, i32 -> vector<8x128xf32>
    %196 = arith.mulf %194, %195 : vector<8x128xf32>
    %197 = vector.extract_strided_slice %196 {offsets = [0, 32], sizes = [8, 32], strides = [1, 1]} : vector<8x128xf32> to vector<8x32xf32>
    %198 = vector.extract_strided_slice %194 {offsets = [0, 0], sizes = [8, 32], strides = [1, 1]} : vector<8x128xf32> to vector<8x32xf32>
    %199 = arith.mulf %198, %185 : vector<8x32xf32>
    %200 = arith.addf %199, %197 : vector<8x32xf32>
    %201 = vector.extract_strided_slice %195 {offsets = [0, 0], sizes = [8, 32], strides = [1, 1]} : vector<8x128xf32> to vector<8x32xf32>
    %202 = math.tanh %200 : vector<8x32xf32>
    %203 = arith.mulf %201, %202 : vector<8x32xf32>
    %204 = arith.select %102, %203, %184 : vector<8x32xi1>, vector<8x32xf32>
    %205 = arith.select %102, %200, %185 : vector<8x32xi1>, vector<8x32xf32>
    %cst_39 = arith.constant dense<0.000000e+00> : vector<8x128xf32>
    %206 = tpu.matmul %204, %123, %cst_39 {dimension_numbers = #tpu.dot_dimension_numbers<[1], [0], [0], [1], [0, 0, 1, 1], [], []>} : vector<8x32xf32>, vector<32x128xf32>, vector<8x128xf32> -> vector<8x128xf32>
    %207 = arith.addf %105, %206 : vector<8x128xf32>
    %208 = math.tanh %207 : vector<8x128xf32>
    %209 = arith.negf %207 : vector<8x128xf32>
    %210 = math.exp %209 : vector<8x128xf32>
    %cst_40 = arith.constant 1.000000e+00 : f32
    %211 = vector.broadcast %cst_40 : f32 to vector<8x128xf32>
    %212 = arith.addf %211, %210 : vector<8x128xf32>
    %213 = arith.divf %211, %212 : vector<8x128xf32>
    %214 = arith.select %41, %208, %213 : vector<8x128xi1>, vector<8x128xf32>
    %c64_i32_41 = arith.constant 64 : i32
    %215 = tpu.dynamic_rotate %214 by %c64_i32_41 dim 1 : vector<8x128xf32>, i32 -> vector<8x128xf32>
    %216 = arith.mulf %214, %215 : vector<8x128xf32>
    %217 = vector.extract_strided_slice %216 {offsets = [0, 32], sizes = [8, 32], strides = [1, 1]} : vector<8x128xf32> to vector<8x32xf32>
    %218 = vector.extract_strided_slice %214 {offsets = [0, 0], sizes = [8, 32], strides = [1, 1]} : vector<8x128xf32> to vector<8x32xf32>
    %219 = arith.mulf %218, %205 : vector<8x32xf32>
    %220 = arith.addf %219, %217 : vector<8x32xf32>
    %221 = vector.extract_strided_slice %215 {offsets = [0, 0], sizes = [8, 32], strides = [1, 1]} : vector<8x128xf32> to vector<8x32xf32>
    %222 = math.tanh %220 : vector<8x32xf32>
    %223 = arith.mulf %221, %222 : vector<8x32xf32>
    %224 = arith.select %112, %223, %204 : vector<8x32xi1>, vector<8x32xf32>
    %225 = arith.select %112, %220, %205 : vector<8x32xi1>, vector<8x32xf32>
    %cst_42 = arith.constant dense<0.000000e+00> : vector<8x128xf32>
    %226 = tpu.matmul %224, %123, %cst_42 {dimension_numbers = #tpu.dot_dimension_numbers<[1], [0], [0], [1], [0, 0, 1, 1], [], []>} : vector<8x32xf32>, vector<32x128xf32>, vector<8x128xf32> -> vector<8x128xf32>
    %227 = arith.addf %115, %226 : vector<8x128xf32>
    %228 = math.tanh %227 : vector<8x128xf32>
    %229 = arith.negf %227 : vector<8x128xf32>
    %230 = math.exp %229 : vector<8x128xf32>
    %cst_43 = arith.constant 1.000000e+00 : f32
    %231 = vector.broadcast %cst_43 : f32 to vector<8x128xf32>
    %232 = arith.addf %231, %230 : vector<8x128xf32>
    %233 = arith.divf %231, %232 : vector<8x128xf32>
    %234 = arith.select %41, %228, %233 : vector<8x128xi1>, vector<8x128xf32>
    %c64_i32_44 = arith.constant 64 : i32
    %235 = tpu.dynamic_rotate %234 by %c64_i32_44 dim 1 : vector<8x128xf32>, i32 -> vector<8x128xf32>
    %236 = arith.mulf %234, %235 : vector<8x128xf32>
    %237 = vector.extract_strided_slice %236 {offsets = [0, 32], sizes = [8, 32], strides = [1, 1]} : vector<8x128xf32> to vector<8x32xf32>
    %238 = vector.extract_strided_slice %234 {offsets = [0, 0], sizes = [8, 32], strides = [1, 1]} : vector<8x128xf32> to vector<8x32xf32>
    %239 = arith.mulf %238, %225 : vector<8x32xf32>
    %240 = arith.addf %239, %237 : vector<8x32xf32>
    %241 = vector.extract_strided_slice %235 {offsets = [0, 0], sizes = [8, 32], strides = [1, 1]} : vector<8x128xf32> to vector<8x32xf32>
    %242 = math.tanh %240 : vector<8x32xf32>
    %243 = arith.mulf %241, %242 : vector<8x32xf32>
    %244 = arith.select %122, %243, %224 : vector<8x32xi1>, vector<8x32xf32>
    %c0_45 = arith.constant 0 : index
    %c0_46 = arith.constant 0 : index
    %245 = vector.load %arg7[%c0_45, %c0_46] : memref<32x1xf32, #tpu.memory_space<vmem>>, vector<32x1xf32>
    %cst_47 = arith.constant dense<0.000000e+00> : vector<8x1xf32>
    %246 = tpu.matmul %244, %245, %cst_47 {dimension_numbers = #tpu.dot_dimension_numbers<[1], [0], [0], [1], [0, 0, 1, 1], [], []>} : vector<8x32xf32>, vector<32x1xf32>, vector<8x1xf32> -> vector<8x1xf32>
    %c0_48 = arith.constant 0 : index
    %c0_49 = arith.constant 0 : index
    %247 = vector.load %arg8[%c0_48, %c0_49] : memref<1x1xf32, #tpu.memory_space<vmem>>, vector<1x1xf32>
    %248 = vector.broadcast %247 : vector<1x1xf32> to vector<8x1xf32>
    %249 = arith.addf %246, %248 : vector<8x1xf32>
    %250 = arith.negf %249 : vector<8x1xf32>
    %251 = math.exp %250 : vector<8x1xf32>
    %cst_50 = arith.constant 1.000000e+00 : f32
    %252 = vector.broadcast %cst_50 : f32 to vector<8x1xf32>
    %253 = arith.addf %252, %251 : vector<8x1xf32>
    %254 = arith.divf %252, %253 : vector<8x1xf32>
    %c0_51 = arith.constant 0 : index
    %c0_52 = arith.constant 0 : index
    %255 = vector.load %arg9[%c0_51, %c0_52] : memref<8x1xf32, #tpu.memory_space<vmem>>, vector<8x1xf32>
    tpu.vector_store %arg9[%c0_51, %c0_52], %254 {strides = array<i32>} : memref<8x1xf32, #tpu.memory_space<vmem>>, vector<8x1xf32>,
    return
  }
}

</mosaic_0001>

<llo_original>
// kernel: avg_forward.1
$region0: #{avg_forward.1}
  #allocation0 [shape = 'u32[]', space=smem, size = 0x4, offset = 0x4, fixed_abs, tag = 'smem constant byte address 0x4 - core index']
  #allocation1 [shape = 'u32[72,128]{1,0:T(1,128)}', space=vmem, size = 0x9000, scoped, tag = 'internal scratch']
  #allocation2 [shape = 'f32[1,1]{1,0:T(1,128)S(1)}', space=vmem, size = 0x200, scoped, tag = 'scoped memory for avg_forward.1']
  %s0 = inlined_call_operand.vmem [shape: s32[48,11], index: 0, kind: input, shape index: {}]
  %s1 = inlined_call_operand.vmem [shape: f32[64,128], index: 1, kind: input, shape index: {}]
  %s2 = inlined_call_operand.vmem [shape: f32[3,128], index: 2, kind: input, shape index: {}]
  %s3 = inlined_call_operand.vmem [shape: f32[1,128], index: 3, kind: input, shape index: {}]
  %s4 = inlined_call_operand.hbm [shape: f32[32,128], index: 4, kind: input, shape index: {}]
  %s5 = inlined_call_operand.vmem [shape: f32[8,32], index: 5, kind: input, shape index: {}]
  %s6 = inlined_call_operand.vmem [shape: f32[8,32], index: 6, kind: input, shape index: {}]
  %s7 = inlined_call_operand.vmem [shape: f32[32,1], index: 7, kind: input, shape index: {}]
  %s8 = inlined_call_operand.<no memory space> [shape: f32[1,1], index: 8, kind: input, shape index: {}]
  %s9 = inlined_call_operand.vmem [shape: f32[8,1], index: 9, kind: output, shape index: {}]
  %s10 = sld [smem:[#allocation0]]
  $region50: #{avg_forward.1} parent=0
    _
  %s12 = ssub.s32 1, %s10
  %s13 = scalar_select 0, %s12, %s10
  %v14 = vstv %s8
  %15 = vst [vmem:[#allocation2] sm:$0x1] %v14
  $region1: #{avg_forward.1} parent=0
    #allocation3 [shape = 'u8[16384]{0}', space=vmem, size = 0x4000, scoped, tag = 'input window, operand 4, single buffered']
    #allocation4 [shape = 's32[1]{0}', space=sflag, size = 0x4, scoped, tag = 'scoped memory for avg_forward.1']
    %16 = vsyncpa [#allocation4], 0
    // Predicated region
    $region2: #{avg_forward.1} parent=1 // pred_check
      _
    $region3: #{avg_forward.1} parent=1 // pred_check_branch
      %18 = sbr.rel (0) target = $region5
    $region4: #{avg_forward.1} parent=1 // pred_region
      _
    $region5: #{avg_forward.1} parent=1 // pred_fallthru
      _
    // Predicated region
    $region6: #{avg_forward.1} parent=1 // pred_check
      _
    $region7: #{avg_forward.1} parent=1 // pred_check_branch
      %20 = sbr.rel (0) target = $region9
    $region8: #{avg_forward.1} parent=1 // pred_region
      _
    $region9: #{avg_forward.1} parent=1 // pred_fallthru
      _
    // Predicated region
    $region10: #{avg_forward.1} parent=1 // pred_check
      _
    $region11: #{avg_forward.1} parent=1 // pred_check_branch
      %22 = sbr.rel (0) target = $region13
    $region12: #{avg_forward.1} parent=1 // pred_region
      _
    $region13: #{avg_forward.1} parent=1 // pred_fallthru
      _
    // Predicated region
    $region14: #{avg_forward.1} parent=1 // pred_check
      _
    $region15: #{avg_forward.1} parent=1 // pred_check_branch
      %24 = sbr.rel (0) target = $region17
    $region16: #{avg_forward.1} parent=1 // pred_region
      _
    $region17: #{avg_forward.1} parent=1 // pred_fallthru
      _
    // Predicated region
    $region18: #{avg_forward.1} parent=1 // pred_check
      _
    $region19: #{avg_forward.1} parent=1 // pred_check_branch
      %26 = sbr.rel (0) target = $region21
    $region20: #{avg_forward.1} parent=1 // pred_region
      %28 = vsyncadd [#allocation4], 0
      %s29 = sshll.u32 %s4, 4
      %s30 = int_to_ptr.hbm [resolvable:$true] %s29
      %s31 = sshll.u32 [#allocation3], 4
      %s32 = int_to_ptr.vmem [resolvable:$true] %s31
      %37 = dma.hbm_to_vmem [thread:$0]  %s30, 512, %s32, [#allocation4], 128, 128, 8
    $region21: #{avg_forward.1} parent=1 // pred_fallthru
      _
    // Predicated region
    $region22: #{avg_forward.1} parent=1 // pred_check
      _
    $region23: #{avg_forward.1} parent=1 // pred_check_branch
      %39 = sbr.rel (0) target = $region25
    $region24: #{avg_forward.1} parent=1 // pred_region
      _
    $region25: #{avg_forward.1} parent=1 // pred_fallthru
      _
    // Predicated region
    $region26: #{avg_forward.1} parent=1 // pred_check
      _
    $region27: #{avg_forward.1} parent=1 // pred_check_branch
      %41 = sbr.rel (0) target = $region29
    $region28: #{avg_forward.1} parent=1 // pred_region
      _
    $region29: #{avg_forward.1} parent=1 // pred_fallthru
      _
    // Predicated region
    $region30: #{avg_forward.1} parent=1 // pred_check
      _
    $region31: #{avg_forward.1} parent=1 // pred_check_branch
      %43 = sbr.rel (0) target = $region33
    $region32: #{avg_forward.1} parent=1 // pred_region
      _
    $region33: #{avg_forward.1} parent=1 // pred_fallthru
      _
    // Predicated region
    $region34: #{avg_forward.1} parent=1 // pred_check
      _
    $region35: #{avg_forward.1} parent=1 // pred_check_branch
      %45 = sbr.rel (0) target = $region37
    $region36: #{avg_forward.1} parent=1 // pred_region
      _
    $region37: #{avg_forward.1} parent=1 // pred_fallthru
      _
    // Predicated region
    $region38: #{avg_forward.1} parent=1 // pred_check
      _
    $region39: #{avg_forward.1} parent=1 // pred_check_branch
      %47 = sbr.rel (0) target = $region41
    $region40: #{avg_forward.1} parent=1 // pred_region
      %49 = dma.done [#allocation4], 512
    $region41: #{avg_forward.1} parent=1 // pred_fallthru
      _
    %v50 = vld [vmem:[%s0] sm:$0xff]
    %v51 = vld [vmem:[%s0 + $0x8] sm:$0xff]
    %v52 = vld [vmem:[%s0 + $0x10] sm:$0xff]
    %v53 = vld [vmem:[%s0 + $0x18] sm:$0xff]
    %v54 = vld [vmem:[%s0 + $0x20] sm:$0xff]
    %v55 = vld [vmem:[%s0 + $0x28] sm:$0xff]
    %v56 = vcvt.s32.f32 %v50
    %v57 = vcvt.s32.f32 %v51
    %v58 = vcvt.s32.f32 %v52
    %v59 = vcvt.s32.f32 %v53
    %v60 = vcvt.s32.f32 %v54
    %v61 = vcvt.s32.f32 %v55
    %v62 = vlaneseq
    %v63 = vand.u32 %v62, 127
    %v64 = vperm.slane %v50, 0
    %v65 = vlaneseq
    %v66 = vshrl.u32 %v65, 7
    %v67 = vadd.s32 %v66, 3
    %68 = vset.pattern.permute.xlu0 %v67
    %69 = vperm.xlu0 %68, %v64
    %v70 = vpop.permute.xlu0 %69
    %v71 = vperm.slane %v50, 1
    %v72 = vlaneseq
    %v73 = vshrl.u32 %v72, 7
    %v74 = vadd.s32 %v73, 3
    %75 = vset.pattern.permute.xlu0 %v74
    %76 = vperm.xlu0 %75, %v71
    %v77 = vpop.permute.xlu0 %76
    %v78 = vperm.slane %v50, 2
    %v79 = vlaneseq
    %v80 = vshrl.u32 %v79, 7
    %v81 = vadd.s32 %v80, 3
    %82 = vset.pattern.permute.xlu0 %v81
    %83 = vperm.xlu0 %82, %v78
    %v84 = vpop.permute.xlu0 %83
    %v85 = vperm.slane %v50, 3
    %v86 = vlaneseq
    %v87 = vshrl.u32 %v86, 7
    %v88 = vadd.s32 %v87, 3
    %89 = vset.pattern.permute.xlu0 %v88
    %90 = vperm.xlu0 %89, %v85
    %v91 = vpop.permute.xlu0 %90
    %v92 = vperm.slane %v50, 4
    %v93 = vlaneseq
    %v94 = vshrl.u32 %v93, 7
    %v95 = vadd.s32 %v94, 3
    %96 = vset.pattern.permute.xlu0 %v95
    %97 = vperm.xlu0 %96, %v92
    %v98 = vpop.permute.xlu0 %97
    %v99 = vperm.slane %v50, 5
    %v100 = vlaneseq
    %v101 = vshrl.u32 %v100, 7
    %v102 = vadd.s32 %v101, 3
    %103 = vset.pattern.permute.xlu0 %v102
    %104 = vperm.xlu0 %103, %v99
    %v105 = vpop.permute.xlu0 %104
    %v106 = vperm.slane %v50, 6
    %v107 = vlaneseq
    %v108 = vshrl.u32 %v107, 7
    %v109 = vadd.s32 %v108, 3
    %110 = vset.pattern.permute.xlu0 %v109
    %111 = vperm.xlu0 %110, %v106
    %v112 = vpop.permute.xlu0 %111
    %v113 = vperm.slane %v50, 7
    %v114 = vlaneseq
    %v115 = vshrl.u32 %v114, 7
    %v116 = vadd.s32 %v115, 3
    %117 = vset.pattern.permute.xlu0 %v116
    %118 = vperm.xlu0 %117, %v113
    %v119 = vpop.permute.xlu0 %118
    %v120 = vperm.slane %v51, 0
    %v121 = vlaneseq
    %v122 = vshrl.u32 %v121, 7
    %v123 = vadd.s32 %v122, 3
    %124 = vset.pattern.permute.xlu0 %v123
    %125 = vperm.xlu0 %124, %v120
    %v126 = vpop.permute.xlu0 %125
    %v127 = vperm.slane %v51, 1
    %v128 = vlaneseq
    %v129 = vshrl.u32 %v128, 7
    %v130 = vadd.s32 %v129, 3
    %131 = vset.pattern.permute.xlu0 %v130
    %132 = vperm.xlu0 %131, %v127
    %v133 = vpop.permute.xlu0 %132
    %v134 = vperm.slane %v51, 2
    %v135 = vlaneseq
    %v136 = vshrl.u32 %v135, 7
    %v137 = vadd.s32 %v136, 3
    %138 = vset.pattern.permute.xlu0 %v137
    %139 = vperm.xlu0 %138, %v134
    %v140 = vpop.permute.xlu0 %139
    %v141 = vperm.slane %v51, 3
    %v142 = vlaneseq
    %v143 = vshrl.u32 %v142, 7
    %v144 = vadd.s32 %v143, 3
    %145 = vset.pattern.permute.xlu0 %v144
    %146 = vperm.xlu0 %145, %v141
    %v147 = vpop.permute.xlu0 %146
    %v148 = vperm.slane %v51, 4
    %v149 = vlaneseq
    %v150 = vshrl.u32 %v149, 7
    %v151 = vadd.s32 %v150, 3
    %152 = vset.pattern.permute.xlu0 %v151
    %153 = vperm.xlu0 %152, %v148
    %v154 = vpop.permute.xlu0 %153
    %v155 = vperm.slane %v51, 5
    %v156 = vlaneseq
    %v157 = vshrl.u32 %v156, 7
    %v158 = vadd.s32 %v157, 3
    %159 = vset.pattern.permute.xlu0 %v158
    %160 = vperm.xlu0 %159, %v155
    %v161 = vpop.permute.xlu0 %160
    %v162 = vperm.slane %v51, 6
    %v163 = vlaneseq
    %v164 = vshrl.u32 %v163, 7
    %v165 = vadd.s32 %v164, 3
    %166 = vset.pattern.permute.xlu0 %v165
    %167 = vperm.xlu0 %166, %v162
    %v168 = vpop.permute.xlu0 %167
    %v169 = vperm.slane %v51, 7
    %v170 = vlaneseq
    %v171 = vshrl.u32 %v170, 7
    %v172 = vadd.s32 %v171, 3
    %173 = vset.pattern.permute.xlu0 %v172
    %174 = vperm.xlu0 %173, %v169
    %v175 = vpop.permute.xlu0 %174
    %v176 = vperm.slane %v52, 0
    %v177 = vlaneseq
    %v178 = vshrl.u32 %v177, 7
    %v179 = vadd.s32 %v178, 3
    %180 = vset.pattern.permute.xlu0 %v179
    %181 = vperm.xlu0 %180, %v176
    %v182 = vpop.permute.xlu0 %181
    %v183 = vperm.slane %v52, 1
    %v184 = vlaneseq
    %v185 = vshrl.u32 %v184, 7
    %v186 = vadd.s32 %v185, 3
    %187 = vset.pattern.permute.xlu0 %v186
    %188 = vperm.xlu0 %187, %v183
    %v189 = vpop.permute.xlu0 %188
    %v190 = vperm.slane %v52, 2
    %v191 = vlaneseq
    %v192 = vshrl.u32 %v191, 7
    %v193 = vadd.s32 %v192, 3
    %194 = vset.pattern.permute.xlu0 %v193
    %195 = vperm.xlu0 %194, %v190
    %v196 = vpop.permute.xlu0 %195
    %v197 = vperm.slane %v52, 3
    %v198 = vlaneseq
    %v199 = vshrl.u32 %v198, 7
    %v200 = vadd.s32 %v199, 3
    %201 = vset.pattern.permute.xlu0 %v200
    %202 = vperm.xlu0 %201, %v197
    %v203 = vpop.permute.xlu0 %202
    %v204 = vperm.slane %v52, 4
    %v205 = vlaneseq
    %v206 = vshrl.u32 %v205, 7
    %v207 = vadd.s32 %v206, 3
    %208 = vset.pattern.permute.xlu0 %v207
    %209 = vperm.xlu0 %208, %v204
    %v210 = vpop.permute.xlu0 %209
    %v211 = vperm.slane %v52, 5
    %v212 = vlaneseq
    %v213 = vshrl.u32 %v212, 7
    %v214 = vadd.s32 %v213, 3
    %215 = vset.pattern.permute.xlu0 %v214
    %216 = vperm.xlu0 %215, %v211
    %v217 = vpop.permute.xlu0 %216
    %v218 = vperm.slane %v52, 6
    %v219 = vlaneseq
    %v220 = vshrl.u32 %v219, 7
    %v221 = vadd.s32 %v220, 3
    %222 = vset.pattern.permute.xlu0 %v221
    %223 = vperm.xlu0 %222, %v218
    %v224 = vpop.permute.xlu0 %223
    %v225 = vperm.slane %v52, 7
    %v226 = vlaneseq
    %v227 = vshrl.u32 %v226, 7
    %v228 = vadd.s32 %v227, 3
    %229 = vset.pattern.permute.xlu0 %v228
    %230 = vperm.xlu0 %229, %v225
    %v231 = vpop.permute.xlu0 %230
    %v232 = vperm.slane %v53, 0
    %v233 = vlaneseq
    %v234 = vshrl.u32 %v233, 7
    %v235 = vadd.s32 %v234, 3
    %236 = vset.pattern.permute.xlu0 %v235
    %237 = vperm.xlu0 %236, %v232
    %v238 = vpop.permute.xlu0 %237
    %v239 = vperm.slane %v53, 1
    %v240 = vlaneseq
    %v241 = vshrl.u32 %v240, 7
    %v242 = vadd.s32 %v241, 3
    %243 = vset.pattern.permute.xlu0 %v242
    %244 = vperm.xlu0 %243, %v239
    %v245 = vpop.permute.xlu0 %244
    %v246 = vperm.slane %v53, 2
    %v247 = vlaneseq
    %v248 = vshrl.u32 %v247, 7
    %v249 = vadd.s32 %v248, 3
    %250 = vset.pattern.permute.xlu0 %v249
    %251 = vperm.xlu0 %250, %v246
    %v252 = vpop.permute.xlu0 %251
    %v253 = vperm.slane %v53, 3
    %v254 = vlaneseq
    %v255 = vshrl.u32 %v254, 7
    %v256 = vadd.s32 %v255, 3
    %257 = vset.pattern.permute.xlu0 %v256
    %258 = vperm.xlu0 %257, %v253
    %v259 = vpop.permute.xlu0 %258
    %v260 = vperm.slane %v53, 4
    %v261 = vlaneseq
    %v262 = vshrl.u32 %v261, 7
    %v263 = vadd.s32 %v262, 3
    %264 = vset.pattern.permute.xlu0 %v263
    %265 = vperm.xlu0 %264, %v260
    %v266 = vpop.permute.xlu0 %265
    %v267 = vperm.slane %v53, 5
    %v268 = vlaneseq
    %v269 = vshrl.u32 %v268, 7
    %v270 = vadd.s32 %v269, 3
    %271 = vset.pattern.permute.xlu0 %v270
    %272 = vperm.xlu0 %271, %v267
    %v273 = vpop.permute.xlu0 %272
    %v274 = vperm.slane %v53, 6
    %v275 = vlaneseq
    %v276 = vshrl.u32 %v275, 7
    %v277 = vadd.s32 %v276, 3
    %278 = vset.pattern.permute.xlu0 %v277
    %279 = vperm.xlu0 %278, %v274
    %v280 = vpop.permute.xlu0 %279
    %v281 = vperm.slane %v53, 7
    %v282 = vlaneseq
    %v283 = vshrl.u32 %v282, 7
    %v284 = vadd.s32 %v283, 3
    %285 = vset.pattern.permute.xlu0 %v284
    %286 = vperm.xlu0 %285, %v281
    %v287 = vpop.permute.xlu0 %286
    %v288 = vperm.slane %v54, 0
    %v289 = vlaneseq
    %v290 = vshrl.u32 %v289, 7
    %v291 = vadd.s32 %v290, 3
    %292 = vset.pattern.permute.xlu0 %v291
    %293 = vperm.xlu0 %292, %v288
    %v294 = vpop.permute.xlu0 %293
    %v295 = vperm.slane %v54, 1
    %v296 = vlaneseq
    %v297 = vshrl.u32 %v296, 7
    %v298 = vadd.s32 %v297, 3
    %299 = vset.pattern.permute.xlu0 %v298
    %300 = vperm.xlu0 %299, %v295
    %v301 = vpop.permute.xlu0 %300
    %v302 = vperm.slane %v54, 2
    %v303 = vlaneseq
    %v304 = vshrl.u32 %v303, 7
    %v305 = vadd.s32 %v304, 3
    %306 = vset.pattern.permute.xlu0 %v305
    %307 = vperm.xlu0 %306, %v302
    %v308 = vpop.permute.xlu0 %307
    %v309 = vperm.slane %v54, 3
    %v310 = vlaneseq
    %v311 = vshrl.u32 %v310, 7
    %v312 = vadd.s32 %v311, 3
    %313 = vset.pattern.permute.xlu0 %v312
    %314 = vperm.xlu0 %313, %v309
    %v315 = vpop.permute.xlu0 %314
    %v316 = vperm.slane %v54, 4
    %v317 = vlaneseq
    %v318 = vshrl.u32 %v317, 7
    %v319 = vadd.s32 %v318, 3
    %320 = vset.pattern.permute.xlu0 %v319
    %321 = vperm.xlu0 %320, %v316
    %v322 = vpop.permute.xlu0 %321
    %v323 = vperm.slane %v54, 5
    %v324 = vlaneseq
    %v325 = vshrl.u32 %v324, 7
    %v326 = vadd.s32 %v325, 3
    %327 = vset.pattern.permute.xlu0 %v326
    %328 = vperm.xlu0 %327, %v323
    %v329 = vpop.permute.xlu0 %328
    %v330 = vperm.slane %v54, 6
    %v331 = vlaneseq
    %v332 = vshrl.u32 %v331, 7
    %v333 = vadd.s32 %v332, 3
    %334 = vset.pattern.permute.xlu0 %v333
    %335 = vperm.xlu0 %334, %v330
    %v336 = vpop.permute.xlu0 %335
    %v337 = vperm.slane %v54, 7
    %v338 = vlaneseq
    %v339 = vshrl.u32 %v338, 7
    %v340 = vadd.s32 %v339, 3
    %341 = vset.pattern.permute.xlu0 %v340
    %342 = vperm.xlu0 %341, %v337
    %v343 = vpop.permute.xlu0 %342
    %v344 = vperm.slane %v55, 0
    %v345 = vlaneseq
    %v346 = vshrl.u32 %v345, 7
    %v347 = vadd.s32 %v346, 3
    %348 = vset.pattern.permute.xlu0 %v347
    %349 = vperm.xlu0 %348, %v344
    %v350 = vpop.permute.xlu0 %349
    %v351 = vperm.slane %v55, 1
    %v352 = vlaneseq
    %v353 = vshrl.u32 %v352, 7
    %v354 = vadd.s32 %v353, 3
    %355 = vset.pattern.permute.xlu0 %v354
    %356 = vperm.xlu0 %355, %v351
    %v357 = vpop.permute.xlu0 %356
    %v358 = vperm.slane %v55, 2
    %v359 = vlaneseq
    %v360 = vshrl.u32 %v359, 7
    %v361 = vadd.s32 %v360, 3
    %362 = vset.pattern.permute.xlu0 %v361
    %363 = vperm.xlu0 %362, %v358
    %v364 = vpop.permute.xlu0 %363
    %v365 = vperm.slane %v55, 3
    %v366 = vlaneseq
    %v367 = vshrl.u32 %v366, 7
    %v368 = vadd.s32 %v367, 3
    %369 = vset.pattern.permute.xlu0 %v368
    %370 = vperm.xlu0 %369, %v365
    %v371 = vpop.permute.xlu0 %370
    %v372 = vperm.slane %v55, 4
    %v373 = vlaneseq
    %v374 = vshrl.u32 %v373, 7
    %v375 = vadd.s32 %v374, 3
    %376 = vset.pattern.permute.xlu0 %v375
    %377 = vperm.xlu0 %376, %v372
    %v378 = vpop.permute.xlu0 %377
    %v379 = vperm.slane %v55, 5
    %v380 = vlaneseq
    %v381 = vshrl.u32 %v380, 7
    %v382 = vadd.s32 %v381, 3
    %383 = vset.pattern.permute.xlu0 %v382
    %384 = vperm.xlu0 %383, %v379
    %v385 = vpop.permute.xlu0 %384
    %v386 = vperm.slane %v55, 6
    %v387 = vlaneseq
    %v388 = vshrl.u32 %v387, 7
    %v389 = vadd.s32 %v388, 3
    %390 = vset.pattern.permute.xlu0 %v389
    %391 = vperm.xlu0 %390, %v386
    %v392 = vpop.permute.xlu0 %391
    %v393 = vperm.slane %v55, 7
    %v394 = vlaneseq
    %v395 = vshrl.u32 %v394, 7
    %v396 = vadd.s32 %v395, 3
    %397 = vset.pattern.permute.xlu0 %v396
    %398 = vperm.xlu0 %397, %v393
    %v399 = vpop.permute.xlu0 %398
    %vm400 = vcmp.eq.s32.totalorder %v70, %v63
    %vm401 = vcmp.eq.s32.totalorder %v77, %v63
    %vm402 = vcmp.eq.s32.totalorder %v84, %v63
    %vm403 = vcmp.eq.s32.totalorder %v91, %v63
    %vm404 = vcmp.eq.s32.totalorder %v98, %v63
    %vm405 = vcmp.eq.s32.totalorder %v105, %v63
    %vm406 = vcmp.eq.s32.totalorder %v112, %v63
    %vm407 = vcmp.eq.s32.totalorder %v119, %v63
    %vm408 = vcmp.eq.s32.totalorder %v126, %v63
    %vm409 = vcmp.eq.s32.totalorder %v133, %v63
    %vm410 = vcmp.eq.s32.totalorder %v140, %v63
    %vm411 = vcmp.eq.s32.totalorder %v147, %v63
    %vm412 = vcmp.eq.s32.totalorder %v154, %v63
    %vm413 = vcmp.eq.s32.totalorder %v161, %v63
    %vm414 = vcmp.eq.s32.totalorder %v168, %v63
    %vm415 = vcmp.eq.s32.totalorder %v175, %v63
    %vm416 = vcmp.eq.s32.totalorder %v182, %v63
    %vm417 = vcmp.eq.s32.totalorder %v189, %v63
    %vm418 = vcmp.eq.s32.totalorder %v196, %v63
    %vm419 = vcmp.eq.s32.totalorder %v203, %v63
    %vm420 = vcmp.eq.s32.totalorder %v210, %v63
    %vm421 = vcmp.eq.s32.totalorder %v217, %v63
    %vm422 = vcmp.eq.s32.totalorder %v224, %v63
    %vm423 = vcmp.eq.s32.totalorder %v231, %v63
    %vm424 = vcmp.eq.s32.totalorder %v238, %v63
    %vm425 = vcmp.eq.s32.totalorder %v245, %v63
    %vm426 = vcmp.eq.s32.totalorder %v252, %v63
    %vm427 = vcmp.eq.s32.totalorder %v259, %v63
    %vm428 = vcmp.eq.s32.totalorder %v266, %v63
    %vm429 = vcmp.eq.s32.totalorder %v273, %v63
    %vm430 = vcmp.eq.s32.totalorder %v280, %v63
    %vm431 = vcmp.eq.s32.totalorder %v287, %v63
    %vm432 = vcmp.eq.s32.totalorder %v294, %v63
    %vm433 = vcmp.eq.s32.totalorder %v301, %v63
    %vm434 = vcmp.eq.s32.totalorder %v308, %v63
    %vm435 = vcmp.eq.s32.totalorder %v315, %v63
    %vm436 = vcmp.eq.s32.totalorder %v322, %v63
    %vm437 = vcmp.eq.s32.totalorder %v329, %v63
    %vm438 = vcmp.eq.s32.totalorder %v336, %v63
    %vm439 = vcmp.eq.s32.totalorder %v343, %v63
    %vm440 = vcmp.eq.s32.totalorder %v350, %v63
    %vm441 = vcmp.eq.s32.totalorder %v357, %v63
    %vm442 = vcmp.eq.s32.totalorder %v364, %v63
    %vm443 = vcmp.eq.s32.totalorder %v371, %v63
    %vm444 = vcmp.eq.s32.totalorder %v378, %v63
    %vm445 = vcmp.eq.s32.totalorder %v385, %v63
    %vm446 = vcmp.eq.s32.totalorder %v392, %v63
    %vm447 = vcmp.eq.s32.totalorder %v399, %v63
    %v448 = vsel %vm400, 1, 0
    %v449 = vsel %vm401, 1, 0
    %v450 = vsel %vm402, 1, 0
    %v451 = vsel %vm403, 1, 0
    %v452 = vsel %vm404, 1, 0
    %v453 = vsel %vm405, 1, 0
    %v454 = vsel %vm406, 1, 0
    %v455 = vsel %vm407, 1, 0
    %v456 = vsel %vm408, 1, 0
    %v457 = vsel %vm409, 1, 0
    %v458 = vsel %vm410, 1, 0
    %v459 = vsel %vm411, 1, 0
    %v460 = vsel %vm412, 1, 0
    %v461 = vsel %vm413, 1, 0
    %v462 = vsel %vm414, 1, 0
    %v463 = vsel %vm415, 1, 0
    %v464 = vsel %vm416, 1, 0
    %v465 = vsel %vm417, 1, 0
    %v466 = vsel %vm418, 1, 0
    %v467 = vsel %vm419, 1, 0
    %v468 = vsel %vm420, 1, 0
    %v469 = vsel %vm421, 1, 0
    %v470 = vsel %vm422, 1, 0
    %v471 = vsel %vm423, 1, 0
    %v472 = vsel %vm424, 1, 0
    %v473 = vsel %vm425, 1, 0
    %v474 = vsel %vm426, 1, 0
    %v475 = vsel %vm427, 1, 0
    %v476 = vsel %vm428, 1, 0
    %v477 = vsel %vm429, 1, 0
    %v478 = vsel %vm430, 1, 0
    %v479 = vsel %vm431, 1, 0
    %v480 = vsel %vm432, 1, 0
    %v481 = vsel %vm433, 1, 0
    %v482 = vsel %vm434, 1, 0
    %v483 = vsel %vm435, 1, 0
    %v484 = vsel %vm436, 1, 0
    %v485 = vsel %vm437, 1, 0
    %v486 = vsel %vm438, 1, 0
    %v487 = vsel %vm439, 1, 0
    %v488 = vsel %vm440, 1, 0
    %v489 = vsel %vm441, 1, 0
    %v490 = vsel %vm442, 1, 0
    %v491 = vsel %vm443, 1, 0
    %v492 = vsel %vm444, 1, 0
    %v493 = vsel %vm445, 1, 0
    %v494 = vsel %vm446, 1, 0
    %v495 = vsel %vm447, 1, 0
    %v496 = vcvt.s32.f32 %v448
    %v497 = vcvt.s32.f32 %v449
    %v498 = vcvt.s32.f32 %v450
    %v499 = vcvt.s32.f32 %v451
    %v500 = vcvt.s32.f32 %v452
    %v501 = vcvt.s32.f32 %v453
    %v502 = vcvt.s32.f32 %v454
    %v503 = vcvt.s32.f32 %v455
    %v504 = vcvt.s32.f32 %v456
    %v505 = vcvt.s32.f32 %v457
    %v506 = vcvt.s32.f32 %v458
    %v507 = vcvt.s32.f32 %v459
    %v508 = vcvt.s32.f32 %v460
    %v509 = vcvt.s32.f32 %v461
    %v510 = vcvt.s32.f32 %v462
    %v511 = vcvt.s32.f32 %v463
    %v512 = vcvt.s32.f32 %v464
    %v513 = vcvt.s32.f32 %v465
    %v514 = vcvt.s32.f32 %v466
    %v515 = vcvt.s32.f32 %v467
    %v516 = vcvt.s32.f32 %v468
    %v517 = vcvt.s32.f32 %v469
    %v518 = vcvt.s32.f32 %v470
    %v519 = vcvt.s32.f32 %v471
    %v520 = vcvt.s32.f32 %v472
    %v521 = vcvt.s32.f32 %v473
    %v522 = vcvt.s32.f32 %v474
    %v523 = vcvt.s32.f32 %v475
    %v524 = vcvt.s32.f32 %v476
    %v525 = vcvt.s32.f32 %v477
    %v526 = vcvt.s32.f32 %v478
    %v527 = vcvt.s32.f32 %v479
    %v528 = vcvt.s32.f32 %v480
    %v529 = vcvt.s32.f32 %v481
    %v530 = vcvt.s32.f32 %v482
    %v531 = vcvt.s32.f32 %v483
    %v532 = vcvt.s32.f32 %v484
    %v533 = vcvt.s32.f32 %v485
    %v534 = vcvt.s32.f32 %v486
    %v535 = vcvt.s32.f32 %v487
    %v536 = vcvt.s32.f32 %v488
    %v537 = vcvt.s32.f32 %v489
    %v538 = vcvt.s32.f32 %v490
    %v539 = vcvt.s32.f32 %v491
    %v540 = vcvt.s32.f32 %v492
    %v541 = vcvt.s32.f32 %v493
    %v542 = vcvt.s32.f32 %v494
    %v543 = vcvt.s32.f32 %v495
    %vm544 = vcmask 523264
    %v545 = vsel %vm544, %v496, 0.0
    %v546 = vrot.slane %v545, 4
    %v547 = vadd.f32 %v545, %v546
    %v548 = vrot.slane %v547, 2
    %v549 = vadd.f32 %v547, %v548
    %v550 = vrot.slane %v549, 1
    %v551 = vadd.f32 %v549, %v550
    %v552 = vsel %vm544, %v497, 0.0
    %v553 = vrot.slane %v552, 4
    %v554 = vadd.f32 %v552, %v553
    %v555 = vrot.slane %v554, 2
    %v556 = vadd.f32 %v554, %v555
    %v557 = vrot.slane %v556, 1
    %v558 = vadd.f32 %v556, %v557
    %v559 = vsel %vm544, %v498, 0.0
    %v560 = vrot.slane %v559, 4
    %v561 = vadd.f32 %v559, %v560
    %v562 = vrot.slane %v561, 2
    %v563 = vadd.f32 %v561, %v562
    %v564 = vrot.slane %v563, 1
    %v565 = vadd.f32 %v563, %v564
    %v566 = vsel %vm544, %v499, 0.0
    %v567 = vrot.slane %v566, 4
    %v568 = vadd.f32 %v566, %v567
    %v569 = vrot.slane %v568, 2
    %v570 = vadd.f32 %v568, %v569
    %v571 = vrot.slane %v570, 1
    %v572 = vadd.f32 %v570, %v571
    %v573 = vsel %vm544, %v500, 0.0
    %v574 = vrot.slane %v573, 4
    %v575 = vadd.f32 %v573, %v574
    %v576 = vrot.slane %v575, 2
    %v577 = vadd.f32 %v575, %v576
    %v578 = vrot.slane %v577, 1
    %v579 = vadd.f32 %v577, %v578
    %v580 = vsel %vm544, %v501, 0.0
    %v581 = vrot.slane %v580, 4
    %v582 = vadd.f32 %v580, %v581
    %v583 = vrot.slane %v582, 2
    %v584 = vadd.f32 %v582, %v583
    %v585 = vrot.slane %v584, 1
    %v586 = vadd.f32 %v584, %v585
    %v587 = vsel %vm544, %v502, 0.0
    %v588 = vrot.slane %v587, 4
    %v589 = vadd.f32 %v587, %v588
    %v590 = vrot.slane %v589, 2
    %v591 = vadd.f32 %v589, %v590
    %v592 = vrot.slane %v591, 1
    %v593 = vadd.f32 %v591, %v592
    %v594 = vsel %vm544, %v503, 0.0
    %v595 = vrot.slane %v594, 4
    %v596 = vadd.f32 %v594, %v595
    %v597 = vrot.slane %v596, 2
    %v598 = vadd.f32 %v596, %v597
    %v599 = vrot.slane %v598, 1
    %v600 = vadd.f32 %v598, %v599
    %v601 = vsel %vm544, %v504, 0.0
    %v602 = vrot.slane %v601, 4
    %v603 = vadd.f32 %v601, %v602
    %v604 = vrot.slane %v603, 2
    %v605 = vadd.f32 %v603, %v604
    %v606 = vrot.slane %v605, 1
    %v607 = vadd.f32 %v605, %v606
    %v608 = vsel %vm544, %v505, 0.0
    %v609 = vrot.slane %v608, 4
    %v610 = vadd.f32 %v608, %v609
    %v611 = vrot.slane %v610, 2
    %v612 = vadd.f32 %v610, %v611
    %v613 = vrot.slane %v612, 1
    %v614 = vadd.f32 %v612, %v613
    %v615 = vsel %vm544, %v506, 0.0
    %v616 = vrot.slane %v615, 4
    %v617 = vadd.f32 %v615, %v616
    %v618 = vrot.slane %v617, 2
    %v619 = vadd.f32 %v617, %v618
    %v620 = vrot.slane %v619, 1
    %v621 = vadd.f32 %v619, %v620
    %v622 = vsel %vm544, %v507, 0.0
    %v623 = vrot.slane %v622, 4
    %v624 = vadd.f32 %v622, %v623
    %v625 = vrot.slane %v624, 2
    %v626 = vadd.f32 %v624, %v625
    %v627 = vrot.slane %v626, 1
    %v628 = vadd.f32 %v626, %v627
    %v629 = vsel %vm544, %v508, 0.0
    %v630 = vrot.slane %v629, 4
    %v631 = vadd.f32 %v629, %v630
    %v632 = vrot.slane %v631, 2
    %v633 = vadd.f32 %v631, %v632
    %v634 = vrot.slane %v633, 1
    %v635 = vadd.f32 %v633, %v634
    %v636 = vsel %vm544, %v509, 0.0
    %v637 = vrot.slane %v636, 4
    %v638 = vadd.f32 %v636, %v637
    %v639 = vrot.slane %v638, 2
    %v640 = vadd.f32 %v638, %v639
    %v641 = vrot.slane %v640, 1
    %v642 = vadd.f32 %v640, %v641
    %v643 = vsel %vm544, %v510, 0.0
    %v644 = vrot.slane %v643, 4
    %v645 = vadd.f32 %v643, %v644
    %v646 = vrot.slane %v645, 2
    %v647 = vadd.f32 %v645, %v646
    %v648 = vrot.slane %v647, 1
    %v649 = vadd.f32 %v647, %v648
    %v650 = vsel %vm544, %v511, 0.0
    %v651 = vrot.slane %v650, 4
    %v652 = vadd.f32 %v650, %v651
    %v653 = vrot.slane %v652, 2
    %v654 = vadd.f32 %v652, %v653
    %v655 = vrot.slane %v654, 1
    %v656 = vadd.f32 %v654, %v655
    %v657 = vsel %vm544, %v512, 0.0
    %v658 = vrot.slane %v657, 4
    %v659 = vadd.f32 %v657, %v658
    %v660 = vrot.slane %v659, 2
    %v661 = vadd.f32 %v659, %v660
    %v662 = vrot.slane %v661, 1
    %v663 = vadd.f32 %v661, %v662
    %v664 = vsel %vm544, %v513, 0.0
    %v665 = vrot.slane %v664, 4
    %v666 = vadd.f32 %v664, %v665
    %v667 = vrot.slane %v666, 2
    %v668 = vadd.f32 %v666, %v667
    %v669 = vrot.slane %v668, 1
    %v670 = vadd.f32 %v668, %v669
    %v671 = vsel %vm544, %v514, 0.0
    %v672 = vrot.slane %v671, 4
    %v673 = vadd.f32 %v671, %v672
    %v674 = vrot.slane %v673, 2
    %v675 = vadd.f32 %v673, %v674
    %v676 = vrot.slane %v675, 1
    %v677 = vadd.f32 %v675, %v676
    %v678 = vsel %vm544, %v515, 0.0
    %v679 = vrot.slane %v678, 4
    %v680 = vadd.f32 %v678, %v679
    %v681 = vrot.slane %v680, 2
    %v682 = vadd.f32 %v680, %v681
    %v683 = vrot.slane %v682, 1
    %v684 = vadd.f32 %v682, %v683
    %v685 = vsel %vm544, %v516, 0.0
    %v686 = vrot.slane %v685, 4
    %v687 = vadd.f32 %v685, %v686
    %v688 = vrot.slane %v687, 2
    %v689 = vadd.f32 %v687, %v688
    %v690 = vrot.slane %v689, 1
    %v691 = vadd.f32 %v689, %v690
    %v692 = vsel %vm544, %v517, 0.0
    %v693 = vrot.slane %v692, 4
    %v694 = vadd.f32 %v692, %v693
    %v695 = vrot.slane %v694, 2
    %v696 = vadd.f32 %v694, %v695
    %v697 = vrot.slane %v696, 1
    %v698 = vadd.f32 %v696, %v697
    %v699 = vsel %vm544, %v518, 0.0
    %v700 = vrot.slane %v699, 4
    %v701 = vadd.f32 %v699, %v700
    %v702 = vrot.slane %v701, 2
    %v703 = vadd.f32 %v701, %v702
    %v704 = vrot.slane %v703, 1
    %v705 = vadd.f32 %v703, %v704
    %v706 = vsel %vm544, %v519, 0.0
    %v707 = vrot.slane %v706, 4
    %v708 = vadd.f32 %v706, %v707
    %v709 = vrot.slane %v708, 2
    %v710 = vadd.f32 %v708, %v709
    %v711 = vrot.slane %v710, 1
    %v712 = vadd.f32 %v710, %v711
    %v713 = vsel %vm544, %v520, 0.0
    %v714 = vrot.slane %v713, 4
    %v715 = vadd.f32 %v713, %v714
    %v716 = vrot.slane %v715, 2
    %v717 = vadd.f32 %v715, %v716
    %v718 = vrot.slane %v717, 1
    %v719 = vadd.f32 %v717, %v718
    %v720 = vsel %vm544, %v521, 0.0
    %v721 = vrot.slane %v720, 4
    %v722 = vadd.f32 %v720, %v721
    %v723 = vrot.slane %v722, 2
    %v724 = vadd.f32 %v722, %v723
    %v725 = vrot.slane %v724, 1
    %v726 = vadd.f32 %v724, %v725
    %v727 = vsel %vm544, %v522, 0.0
    %v728 = vrot.slane %v727, 4
    %v729 = vadd.f32 %v727, %v728
    %v730 = vrot.slane %v729, 2
    %v731 = vadd.f32 %v729, %v730
    %v732 = vrot.slane %v731, 1
    %v733 = vadd.f32 %v731, %v732
    %v734 = vsel %vm544, %v523, 0.0
    %v735 = vrot.slane %v734, 4
    %v736 = vadd.f32 %v734, %v735
    %v737 = vrot.slane %v736, 2
    %v738 = vadd.f32 %v736, %v737
    %v739 = vrot.slane %v738, 1
    %v740 = vadd.f32 %v738, %v739
    %v741 = vsel %vm544, %v524, 0.0
    %v742 = vrot.slane %v741, 4
    %v743 = vadd.f32 %v741, %v742
    %v744 = vrot.slane %v743, 2
    %v745 = vadd.f32 %v743, %v744
    %v746 = vrot.slane %v745, 1
    %v747 = vadd.f32 %v745, %v746
    %v748 = vsel %vm544, %v525, 0.0
    %v749 = vrot.slane %v748, 4
    %v750 = vadd.f32 %v748, %v749
    %v751 = vrot.slane %v750, 2
    %v752 = vadd.f32 %v750, %v751
    %v753 = vrot.slane %v752, 1
    %v754 = vadd.f32 %v752, %v753
    %v755 = vsel %vm544, %v526, 0.0
    %v756 = vrot.slane %v755, 4
    %v757 = vadd.f32 %v755, %v756
    %v758 = vrot.slane %v757, 2
    %v759 = vadd.f32 %v757, %v758
    %v760 = vrot.slane %v759, 1
    %v761 = vadd.f32 %v759, %v760
    %v762 = vsel %vm544, %v527, 0.0
    %v763 = vrot.slane %v762, 4
    %v764 = vadd.f32 %v762, %v763
    %v765 = vrot.slane %v764, 2
    %v766 = vadd.f32 %v764, %v765
    %v767 = vrot.slane %v766, 1
    %v768 = vadd.f32 %v766, %v767
    %v769 = vsel %vm544, %v528, 0.0
    %v770 = vrot.slane %v769, 4
    %v771 = vadd.f32 %v769, %v770
    %v772 = vrot.slane %v771, 2
    %v773 = vadd.f32 %v771, %v772
    %v774 = vrot.slane %v773, 1
    %v775 = vadd.f32 %v773, %v774
    %v776 = vsel %vm544, %v529, 0.0
    %v777 = vrot.slane %v776, 4
    %v778 = vadd.f32 %v776, %v777
    %v779 = vrot.slane %v778, 2
    %v780 = vadd.f32 %v778, %v779
    %v781 = vrot.slane %v780, 1
    %v782 = vadd.f32 %v780, %v781
    %v783 = vsel %vm544, %v530, 0.0
    %v784 = vrot.slane %v783, 4
    %v785 = vadd.f32 %v783, %v784
    %v786 = vrot.slane %v785, 2
    %v787 = vadd.f32 %v785, %v786
    %v788 = vrot.slane %v787, 1
    %v789 = vadd.f32 %v787, %v788
    %v790 = vsel %vm544, %v531, 0.0
    %v791 = vrot.slane %v790, 4
    %v792 = vadd.f32 %v790, %v791
    %v793 = vrot.slane %v792, 2
    %v794 = vadd.f32 %v792, %v793
    %v795 = vrot.slane %v794, 1
    %v796 = vadd.f32 %v794, %v795
    %v797 = vsel %vm544, %v532, 0.0
    %v798 = vrot.slane %v797, 4
    %v799 = vadd.f32 %v797, %v798
    %v800 = vrot.slane %v799, 2
    %v801 = vadd.f32 %v799, %v800
    %v802 = vrot.slane %v801, 1
    %v803 = vadd.f32 %v801, %v802
    %v804 = vsel %vm544, %v533, 0.0
    %v805 = vrot.slane %v804, 4
    %v806 = vadd.f32 %v804, %v805
    %v807 = vrot.slane %v806, 2
    %v808 = vadd.f32 %v806, %v807
    %v809 = vrot.slane %v808, 1
    %v810 = vadd.f32 %v808, %v809
    %v811 = vsel %vm544, %v534, 0.0
    %v812 = vrot.slane %v811, 4
    %v813 = vadd.f32 %v811, %v812
    %v814 = vrot.slane %v813, 2
    %v815 = vadd.f32 %v813, %v814
    %v816 = vrot.slane %v815, 1
    %v817 = vadd.f32 %v815, %v816
    %v818 = vsel %vm544, %v535, 0.0
    %v819 = vrot.slane %v818, 4
    %v820 = vadd.f32 %v818, %v819
    %v821 = vrot.slane %v820, 2
    %v822 = vadd.f32 %v820, %v821
    %v823 = vrot.slane %v822, 1
    %v824 = vadd.f32 %v822, %v823
    %v825 = vsel %vm544, %v536, 0.0
    %v826 = vrot.slane %v825, 4
    %v827 = vadd.f32 %v825, %v826
    %v828 = vrot.slane %v827, 2
    %v829 = vadd.f32 %v827, %v828
    %v830 = vrot.slane %v829, 1
    %v831 = vadd.f32 %v829, %v830
    %v832 = vsel %vm544, %v537, 0.0
    %v833 = vrot.slane %v832, 4
    %v834 = vadd.f32 %v832, %v833
    %v835 = vrot.slane %v834, 2
    %v836 = vadd.f32 %v834, %v835
    %v837 = vrot.slane %v836, 1
    %v838 = vadd.f32 %v836, %v837
    %v839 = vsel %vm544, %v538, 0.0
    %v840 = vrot.slane %v839, 4
    %v841 = vadd.f32 %v839, %v840
    %v842 = vrot.slane %v841, 2
    %v843 = vadd.f32 %v841, %v842
    %v844 = vrot.slane %v843, 1
    %v845 = vadd.f32 %v843, %v844
    %v846 = vsel %vm544, %v539, 0.0
    %v847 = vrot.slane %v846, 4
    %v848 = vadd.f32 %v846, %v847
    %v849 = vrot.slane %v848, 2
    %v850 = vadd.f32 %v848, %v849
    %v851 = vrot.slane %v850, 1
    %v852 = vadd.f32 %v850, %v851
    %v853 = vsel %vm544, %v540, 0.0
    %v854 = vrot.slane %v853, 4
    %v855 = vadd.f32 %v853, %v854
    %v856 = vrot.slane %v855, 2
    %v857 = vadd.f32 %v855, %v856
    %v858 = vrot.slane %v857, 1
    %v859 = vadd.f32 %v857, %v858
    %v860 = vsel %vm544, %v541, 0.0
    %v861 = vrot.slane %v860, 4
    %v862 = vadd.f32 %v860, %v861
    %v863 = vrot.slane %v862, 2
    %v864 = vadd.f32 %v862, %v863
    %v865 = vrot.slane %v864, 1
    %v866 = vadd.f32 %v864, %v865
    %v867 = vsel %vm544, %v542, 0.0
    %v868 = vrot.slane %v867, 4
    %v869 = vadd.f32 %v867, %v868
    %v870 = vrot.slane %v869, 2
    %v871 = vadd.f32 %v869, %v870
    %v872 = vrot.slane %v871, 1
    %v873 = vadd.f32 %v871, %v872
    %v874 = vsel %vm544, %v543, 0.0
    %v875 = vrot.slane %v874, 4
    %v876 = vadd.f32 %v874, %v875
    %v877 = vrot.slane %v876, 2
    %v878 = vadd.f32 %v876, %v877
    %v879 = vrot.slane %v878, 1
    %v880 = vadd.f32 %v878, %v879
    %v881 = vmul.f32 %v551, 0.125
    %v882 = vmul.f32 %v558, 0.125
    %v883 = vmul.f32 %v565, 0.125
    %v884 = vmul.f32 %v572, 0.125
    %v885 = vmul.f32 %v579, 0.125
    %v886 = vmul.f32 %v586, 0.125
    %v887 = vmul.f32 %v593, 0.125
    %v888 = vmul.f32 %v600, 0.125
    %v889 = vmul.f32 %v607, 0.125
    %v890 = vmul.f32 %v614, 0.125
    %v891 = vmul.f32 %v621, 0.125
    %v892 = vmul.f32 %v628, 0.125
    %v893 = vmul.f32 %v635, 0.125
    %v894 = vmul.f32 %v642, 0.125
    %v895 = vmul.f32 %v649, 0.125
    %v896 = vmul.f32 %v656, 0.125
    %v897 = vmul.f32 %v663, 0.125
    %v898 = vmul.f32 %v670, 0.125
    %v899 = vmul.f32 %v677, 0.125
    %v900 = vmul.f32 %v684, 0.125
    %v901 = vmul.f32 %v691, 0.125
    %v902 = vmul.f32 %v698, 0.125
    %v903 = vmul.f32 %v705, 0.125
    %v904 = vmul.f32 %v712, 0.125
    %v905 = vmul.f32 %v719, 0.125
    %v906 = vmul.f32 %v726, 0.125
    %v907 = vmul.f32 %v733, 0.125
    %v908 = vmul.f32 %v740, 0.125
    %v909 = vmul.f32 %v747, 0.125
    %v910 = vmul.f32 %v754, 0.125
    %v911 = vmul.f32 %v761, 0.125
    %v912 = vmul.f32 %v768, 0.125
    %v913 = vmul.f32 %v775, 0.125
    %v914 = vmul.f32 %v782, 0.125
    %v915 = vmul.f32 %v789, 0.125
    %v916 = vmul.f32 %v796, 0.125
    %v917 = vmul.f32 %v803, 0.125
    %v918 = vmul.f32 %v810, 0.125
    %v919 = vmul.f32 %v817, 0.125
    %v920 = vmul.f32 %v824, 0.125
    %v921 = vmul.f32 %v831, 0.125
    %v922 = vmul.f32 %v838, 0.125
    %v923 = vmul.f32 %v845, 0.125
    %v924 = vmul.f32 %v852, 0.125
    %v925 = vmul.f32 %v859, 0.125
    %v926 = vmul.f32 %v866, 0.125
    %v927 = vmul.f32 %v873, 0.125
    %v928 = vmul.f32 %v880, 0.125
    %v929 = vld [vmem:[%s1] sm:$0xff]
    %v930 = vld [vmem:[%s1 + $0x8] sm:$0xff]
    %v931 = vld [vmem:[%s1 + $0x10] sm:$0xff]
    %v932 = vld [vmem:[%s1 + $0x18] sm:$0xff]
    %v933 = vld [vmem:[%s1 + $0x20] sm:$0xff]
    %v934 = vld [vmem:[%s1 + $0x28] sm:$0xff]
    %v935 = vld [vmem:[%s1 + $0x30] sm:$0xff]
    %v936 = vld [vmem:[%s1 + $0x38] sm:$0xff]
    %v937 = vld [vmem:[%s2] sm:$0x7]
    %vm938 = vcmask 23552
    %v940 = vsel %vm938, %v56, 0
    %v943 = vsel %vm938, %v57, 0
    %v946 = vsel %vm938, %v58, 0
    %v949 = vsel %vm938, %v59, 0
    %v952 = vsel %vm938, %v60, 0
    %v955 = vsel %vm938, %v61, 0
    %vm957 = vcmask 1042432
    %v959 = vsel %vm957, %v937, 0
    %961 = vmatpush.msra.mxu0 0.0
    %962 = vmatpush.msra.mxu0 0.0
    %963 = vmatpush.msra.mxu0 0.0
    %964 = vmatpush.msra.mxu0 0.0
    %965 = vmatpush.msra.mxu0 0.0
    %966 = vmatpush.msra.mxu0 0.0
    %967 = vmatpush.msra.mxu0 0.0
    %968 = vmatpush.msra.mxu0 0.0
    %969 = vmatpush.msra.mxu0 0.0
    %970 = vmatpush.msra.mxu0 0.0
    %971 = vmatpush.msra.mxu0 0.0
    %972 = vmatpush.msra.mxu0 0.0
    %973 = vmatpush.msra.mxu0 0.0
    %974 = vmatpush.msra.mxu0 0.0
    %975 = vmatpush.msra.mxu0 0.0
    %976 = vmatpush.msra.mxu0 %v959
    %977 = vmatmul.f32.gmra.mxu0 %v940
    %v978 = vpop.f32.mrf.mxu0
    %v979 = vadd.f32 0.0, %v978
    %980 = vmatmul.f32.gmra.mxu0 %v943
    %v981 = vpop.f32.mrf.mxu0
    %v982 = vadd.f32 0.0, %v981
    %983 = vmatmul.f32.gmra.mxu0 %v946
    %v984 = vpop.f32.mrf.mxu0
    %v985 = vadd.f32 0.0, %v984
    %986 = vmatmul.f32.gmra.mxu0 %v949
    %v987 = vpop.f32.mrf.mxu0
    %v988 = vadd.f32 0.0, %v987
    %989 = vmatmul.f32.gmra.mxu0 %v952
    %v990 = vpop.f32.mrf.mxu0
    %v991 = vadd.f32 0.0, %v990
    %992 = vmatmul.f32.gmra.mxu0 %v955
    %v993 = vpop.f32.mrf.mxu0
    %v994 = vadd.f32 0.0, %v993
    %995 = vdwg.mxu0
    %vm1044 = vcmask 1041409
    %v1045 = vsel %vm1044, %v882, %v881
    %vm1046 = vcmask 1042434
    %v1047 = vsel %vm1046, %v883, %v1045
    %vm1048 = vcmask 1043459
    %v1049 = vsel %vm1048, %v884, %v1047
    %vm1050 = vcmask 1044484
    %v1051 = vsel %vm1050, %v885, %v1049
    %vm1052 = vcmask 1045509
    %v1053 = vsel %vm1052, %v886, %v1051
    %vm1054 = vcmask 1046534
    %v1055 = vsel %vm1054, %v887, %v1053
    %vm1056 = vcmask 1047559
    %v1057 = vsel %vm1056, %v888, %v1055
    %v1058 = vsel %vm1044, %v890, %v889
    %v1059 = vsel %vm1046, %v891, %v1058
    %v1060 = vsel %vm1048, %v892, %v1059
    %v1061 = vsel %vm1050, %v893, %v1060
    %v1062 = vsel %vm1052, %v894, %v1061
    %v1063 = vsel %vm1054, %v895, %v1062
    %v1064 = vsel %vm1056, %v896, %v1063
    %v1065 = vsel %vm1044, %v898, %v897
    %v1066 = vsel %vm1046, %v899, %v1065
    %v1067 = vsel %vm1048, %v900, %v1066
    %v1068 = vsel %vm1050, %v901, %v1067
    %v1069 = vsel %vm1052, %v902, %v1068
    %v1070 = vsel %vm1054, %v903, %v1069
    %v1071 = vsel %vm1056, %v904, %v1070
    %v1072 = vsel %vm1044, %v906, %v905
    %v1073 = vsel %vm1046, %v907, %v1072
    %v1074 = vsel %vm1048, %v908, %v1073
    %v1075 = vsel %vm1050, %v909, %v1074
    %v1076 = vsel %vm1052, %v910, %v1075
    %v1077 = vsel %vm1054, %v911, %v1076
    %v1078 = vsel %vm1056, %v912, %v1077
    %v1079 = vsel %vm1044, %v914, %v913
    %v1080 = vsel %vm1046, %v915, %v1079
    %v1081 = vsel %vm1048, %v916, %v1080
    %v1082 = vsel %vm1050, %v917, %v1081
    %v1083 = vsel %vm1052, %v918, %v1082
    %v1084 = vsel %vm1054, %v919, %v1083
    %v1085 = vsel %vm1056, %v920, %v1084
    %v1086 = vsel %vm1044, %v922, %v921
    %v1087 = vsel %vm1046, %v923, %v1086
    %v1088 = vsel %vm1048, %v924, %v1087
    %v1089 = vsel %vm1050, %v925, %v1088
    %v1090 = vsel %vm1052, %v926, %v1089
    %v1091 = vsel %vm1054, %v927, %v1090
    %v1092 = vsel %vm1056, %v928, %v1091
    %v1093 = vsel %vm544, %v1057, 0
    %v1095 = vsel %vm544, %v1064, 0
    %v1097 = vsel %vm544, %v1071, 0
    %v1099 = vsel %vm544, %v1078, 0
    %v1101 = vsel %vm544, %v1085, 0
    %v1103 = vsel %vm544, %v1092, 0
    %1105 = vmatpush.msra.mxu0 0.0
    %1106 = vmatpush.msra.mxu0 0.0
    %1107 = vmatpush.msra.mxu0 0.0
    %1108 = vmatpush.msra.mxu0 0.0
    %1109 = vmatpush.msra.mxu0 0.0
    %1110 = vmatpush.msra.mxu0 0.0
    %1111 = vmatpush.msra.mxu0 0.0
    %1112 = vmatpush.msra.mxu0 0.0
    %1113 = vmatpush.msra.mxu0 %v936
    %1114 = vmatpush.msra.mxu0 %v935
    %1115 = vmatpush.msra.mxu0 %v934
    %1116 = vmatpush.msra.mxu0 %v933
    %1117 = vmatpush.msra.mxu0 %v932
    %1118 = vmatpush.msra.mxu0 %v931
    %1119 = vmatpush.msra.mxu0 %v930
    %1120 = vmatpush.msra.mxu0 %v929
    %1121 = vmatmul.f32.gmra.mxu0 %v1093
    %v1122 = vpop.f32.mrf.mxu0
    %v1123 = vadd.f32 %v979, %v1122
    %1124 = vmatmul.f32.gmra.mxu0 %v1095
    %v1125 = vpop.f32.mrf.mxu0
    %v1126 = vadd.f32 %v982, %v1125
    %1127 = vmatmul.f32.gmra.mxu0 %v1097
    %v1128 = vpop.f32.mrf.mxu0
    %v1129 = vadd.f32 %v985, %v1128
    %1130 = vmatmul.f32.gmra.mxu0 %v1099
    %v1131 = vpop.f32.mrf.mxu0
    %v1132 = vadd.f32 %v988, %v1131
    %1133 = vmatmul.f32.gmra.mxu0 %v1101
    %v1134 = vpop.f32.mrf.mxu0
    %v1135 = vadd.f32 %v991, %v1134
    %1136 = vmatmul.f32.gmra.mxu0 %v1103
    %v1137 = vpop.f32.mrf.mxu0
    %v1138 = vadd.f32 %v994, %v1137
    %1139 = vdwg.mxu0
    %v1140 = vld [vmem:[%s3] sm:$0x1]
    %v1142 = vperm.slane %v1140, 0
    %v1144 = vadd.f32 %v1123, %v1142
    %v1145 = vadd.f32 %v1126, %v1142
    %v1146 = vadd.f32 %v1129, %v1142
    %v1147 = vadd.f32 %v1132, %v1142
    %v1148 = vadd.f32 %v1135, %v1142
    %v1149 = vadd.f32 %v1138, %v1142
    %vm1150 = vcmp.lt.s32.totalorder %v63, 0
    %v1151 = vsub.s32 0, %v63
    %v1152 = vsel %vm1150, %v1151, %v63
    %v1153 = vshrl.u32 %v1152, 5
    %v1154 = vand.u32 %v1152, 31
    %v1155 = vsub.s32 0, %v1154
    %v1156 = vsel %vm1150, %v1155, %v1154
    %vm1157 = vcmp.ne.s32.totalorder %v1156, 0
    %vm1158 = vcmp.lt.s32.totalorder %v1156, 0
    %vm1159 = vmand %vm1158, %vm1157
    %v1160 = vadd.s32 %v1156, 32
    %v1161 = vsel %vm1159, %v1160, %v1156
    %vm1162 = vcmp.lt.s32.totalorder %v1161, 16
    %vm1163 = vcmp.ge.s32.totalorder %v63, 96
    %vm1164 = vcmp.lt.s32.totalorder %v63, 16
    %vm1165 = vcmp.ne.s32.totalorder %v50, 0
    %vm1166 = vcmp.ne.s32.totalorder %v51, 0
    %vm1167 = vcmp.ne.s32.totalorder %v52, 0
    %vm1168 = vcmp.ne.s32.totalorder %v53, 0
    %vm1169 = vcmp.ne.s32.totalorder %v54, 0
    %vm1170 = vcmp.ne.s32.totalorder %v55, 0
    %v1171 = vsel %vm1165, 1, 0
    %v1172 = vsel %vm1166, 1, 0
    %v1173 = vsel %vm1167, 1, 0
    %v1174 = vsel %vm1168, 1, 0
    %v1175 = vsel %vm1169, 1, 0
    %v1176 = vsel %vm1170, 1, 0
    %v1177 = vcvt.s32.f32 %v1171
    %v1178 = vcvt.s32.f32 %v1172
    %v1179 = vcvt.s32.f32 %v1173
    %v1180 = vcvt.s32.f32 %v1174
    %v1181 = vcvt.s32.f32 %v1175
    %v1182 = vcvt.s32.f32 %v1176
    %v1183 = vmul.f32 %v1177, %v1178
    %v1184 = vmul.f32 %v1183, %v1179
    %v1185 = vmul.f32 %v1184, %v1180
    %v1186 = vmul.f32 %v1185, %v1181
    %v1187 = vmul.f32 %v1186, %v1182
    %v1188 = vsel %vm1162, %v1144, %v1149
    %1190 = vset.pattern.permute.xlu0 3
    %1191 = vperm.xlu0 %1190, %v1177
    %v1192 = vpop.permute.xlu0 %1191
    %1195 = vset.pattern.permute.xlu0 3
    %1196 = vperm.xlu0 %1195, %v1187
    %v1197 = vpop.permute.xlu0 %1196
    %v1199 = vsel %vm1164, %v1192, %v1197
    %vm1200 = vcmp.gt.f32.partialorder %v1199, 0.0
    %v1201 = vsel %vm1162, %v1145, %v1148
    %1203 = vset.pattern.permute.xlu0 3
    %1204 = vperm.xlu0 %1203, %v1183
    %v1205 = vpop.permute.xlu0 %1204
    %1208 = vset.pattern.permute.xlu0 3
    %1209 = vperm.xlu0 %1208, %v1186
    %v1210 = vpop.permute.xlu0 %1209
    %v1212 = vsel %vm1164, %v1205, %v1210
    %vm1213 = vcmp.gt.f32.partialorder %v1212, 0.0
    %v1214 = vsel %vm1162, %v1146, %v1147
    %1216 = vset.pattern.permute.xlu0 3
    %1217 = vperm.xlu0 %1216, %v1184
    %v1218 = vpop.permute.xlu0 %1217
    %1221 = vset.pattern.permute.xlu0 3
    %1222 = vperm.xlu0 %1221, %v1185
    %v1223 = vpop.permute.xlu0 %1222
    %v1225 = vsel %vm1164, %v1218, %v1223
    %vm1226 = vcmp.gt.f32.partialorder %v1225, 0.0
    %v1227 = vsel %vm1162, %v1147, %v1146
    %v1228 = vsel %vm1164, %v1223, %v1218
    %vm1229 = vcmp.gt.f32.partialorder %v1228, 0.0
    %v1230 = vsel %vm1162, %v1148, %v1145
    %v1231 = vsel %vm1164, %v1210, %v1205
    %vm1232 = vcmp.gt.f32.partialorder %v1231, 0.0
    %v1233 = vsel %vm1162, %v1149, %v1144
    %v1234 = vsel %vm1164, %v1197, %v1192
    %vm1235 = vcmp.gt.f32.partialorder %v1234, 0.0
    %v1236 = vld [vmem:[#allocation3] sm:$0xff]
    %v1237 = vld [vmem:[#allocation3 + $0x8] sm:$0xff]
    %v1238 = vld [vmem:[#allocation3 + $0x10] sm:$0xff]
    %v1239 = vld [vmem:[#allocation3 + $0x18] sm:$0xff]
    %v1240 = vld [vmem:[%s5] sm:$0xff]
    %v1241 = vld [vmem:[%s6] sm:$0xff]
    %vm1242 = vcmask 261120
    %v1244 = vsel %vm1242, %v1240, 0
    %1246 = vmatpush.msra.mxu0 0.0
    %1247 = vmatpush.msra.mxu0 0.0
    %1248 = vmatpush.msra.mxu0 0.0
    %1249 = vmatpush.msra.mxu0 0.0
    %1250 = vmatpush.msra.mxu0 0.0
    %1251 = vmatpush.msra.mxu0 0.0
    %1252 = vmatpush.msra.mxu0 0.0
    %1253 = vmatpush.msra.mxu0 0.0
    %1254 = vmatpush.msra.mxu0 0.0
    %1255 = vmatpush.msra.mxu0 0.0
    %1256 = vmatpush.msra.mxu0 0.0
    %1257 = vmatpush.msra.mxu0 0.0
    %1258 = vmatpush.msra.mxu0 %v1239
    %1259 = vmatpush.msra.mxu0 %v1238
    %1260 = vmatpush.msra.mxu0 %v1237
    %1261 = vmatpush.msra.mxu0 %v1236
    %1262 = vmatmul.f32.gmra.mxu0 %v1244
    %v1263 = vpop.f32.mrf.mxu0
    %v1264 = vadd.f32 0.0, %v1263
    %1265 = vdwg.mxu0
    %v1266 = vadd.f32 %v1188, %v1264
    %v1267 = vtanh.pop %v1266
    %v1268 = vxor.u32 %v1266, 2147483648
    %v1269 = vmul.f32 %v1268, 1.442695
    %v1270 = vpow.pop %v1269
    %v1271 = vadd.f32 %v1270, 1.0
    %v1272 = vrcp.pop %v1271
    %v1273 = vmul.f32 %v1271, %v1272
    %v1274 = vsub.f32 1.0, %v1273
    %v1275 = vmul.f32 %v1272, %v1274
    %v1276 = vadd.f32 %v1272, %v1275
    %vm1277 = vweird.f32 %v1271
    %vm1278 = vweird.f32 %v1272
    %vm1279 = vmor %vm1277, %vm1278
    %v1280 = vsel %vm1279, %v1272, %v1276
    %v1281 = vand.u32 2147483647, %v1271
    %vm1282 = vcmp.eq.f32.partialorder %v1281, 8.507059e+37
    %v1283 = vand.u32 %v1271, 2147483648
    %v1284 = vor.u32 1.1754944e-38, %v1283
    %v1285 = vsel %vm1282, %v1284, %v1280
    %v1286 = vmul.f32 1.0, %v1285
    %v1287 = vsel %vm1163, %v1267, %v1286
    %1288 = vrot.lane.b32.xlu0 %v1287, 64
    %v1289 = vpop.permute.xlu0 %1288
    %v1290 = vmul.f32 %v1287, %v1289
    %v1291 = vmul.f32 %v1287, %v1241
    %1293 = vrot.lane.b32.xlu0 %v1290, 96
    %v1294 = vpop.permute.xlu0 %1293
    %v1296 = vadd.f32 %v1291, %v1294
    %v1297 = vtanh.pop %v1296
    %v1298 = vmul.f32 %v1289, %v1297
    %v1299 = vsel %vm1200, %v1298, %v1240
    %v1300 = vsel %vm1200, %v1296, %v1241
    %v1302 = vsel %vm1242, %v1299, 0
    %1304 = vmatpush.msra.mxu0 0.0
    %1305 = vmatpush.msra.mxu0 0.0
    %1306 = vmatpush.msra.mxu0 0.0
    %1307 = vmatpush.msra.mxu0 0.0
    %1308 = vmatpush.msra.mxu0 0.0
    %1309 = vmatpush.msra.mxu0 0.0
    %1310 = vmatpush.msra.mxu0 0.0
    %1311 = vmatpush.msra.mxu0 0.0
    %1312 = vmatpush.msra.mxu0 0.0
    %1313 = vmatpush.msra.mxu0 0.0
    %1314 = vmatpush.msra.mxu0 0.0
    %1315 = vmatpush.msra.mxu0 0.0
    %1316 = vmatpush.msra.mxu0 %v1239
    %1317 = vmatpush.msra.mxu0 %v1238
    %1318 = vmatpush.msra.mxu0 %v1237
    %1319 = vmatpush.msra.mxu0 %v1236
    %1320 = vmatmul.f32.gmra.mxu0 %v1302
    %v1321 = vpop.f32.mrf.mxu0
    %v1322 = vadd.f32 0.0, %v1321
    %1323 = vdwg.mxu0
    %v1324 = vadd.f32 %v1201, %v1322
    %v1325 = vtanh.pop %v1324
    %v1326 = vxor.u32 %v1324, 2147483648
    %v1327 = vmul.f32 %v1326, 1.442695
    %v1328 = vpow.pop %v1327
    %v1329 = vadd.f32 %v1328, 1.0
    %v1330 = vrcp.pop %v1329
    %v1331 = vmul.f32 %v1329, %v1330
    %v1332 = vsub.f32 1.0, %v1331
    %v1333 = vmul.f32 %v1330, %v1332
    %v1334 = vadd.f32 %v1330, %v1333
    %vm1335 = vweird.f32 %v1329
    %vm1336 = vweird.f32 %v1330
    %vm1337 = vmor %vm1335, %vm1336
    %v1338 = vsel %vm1337, %v1330, %v1334
    %v1339 = vand.u32 2147483647, %v1329
    %vm1340 = vcmp.eq.f32.partialorder %v1339, 8.507059e+37
    %v1341 = vand.u32 %v1329, 2147483648
    %v1342 = vor.u32 1.1754944e-38, %v1341
    %v1343 = vsel %vm1340, %v1342, %v1338
    %v1344 = vmul.f32 1.0, %v1343
    %v1345 = vsel %vm1163, %v1325, %v1344
    %1346 = vrot.lane.b32.xlu0 %v1345, 64
    %v1347 = vpop.permute.xlu0 %1346
    %v1348 = vmul.f32 %v1345, %v1347
    %v1349 = vmul.f32 %v1345, %v1300
    %1351 = vrot.lane.b32.xlu0 %v1348, 96
    %v1352 = vpop.permute.xlu0 %1351
    %v1354 = vadd.f32 %v1349, %v1352
    %v1355 = vtanh.pop %v1354
    %v1356 = vmul.f32 %v1347, %v1355
    %v1357 = vsel %vm1213, %v1356, %v1299
    %v1358 = vsel %vm1213, %v1354, %v1300
    %v1360 = vsel %vm1242, %v1357, 0
    %1362 = vmatpush.msra.mxu0 0.0
    %1363 = vmatpush.msra.mxu0 0.0
    %1364 = vmatpush.msra.mxu0 0.0
    %1365 = vmatpush.msra.mxu0 0.0
    %1366 = vmatpush.msra.mxu0 0.0
    %1367 = vmatpush.msra.mxu0 0.0
    %1368 = vmatpush.msra.mxu0 0.0
    %1369 = vmatpush.msra.mxu0 0.0
    %1370 = vmatpush.msra.mxu0 0.0
    %1371 = vmatpush.msra.mxu0 0.0
    %1372 = vmatpush.msra.mxu0 0.0
    %1373 = vmatpush.msra.mxu0 0.0
    %1374 = vmatpush.msra.mxu0 %v1239
    %1375 = vmatpush.msra.mxu0 %v1238
    %1376 = vmatpush.msra.mxu0 %v1237
    %1377 = vmatpush.msra.mxu0 %v1236
    %1378 = vmatmul.f32.gmra.mxu0 %v1360
    %v1379 = vpop.f32.mrf.mxu0
    %v1380 = vadd.f32 0.0, %v1379
    %1381 = vdwg.mxu0
    %v1382 = vadd.f32 %v1214, %v1380
    %v1383 = vtanh.pop %v1382
    %v1384 = vxor.u32 %v1382, 2147483648
    %v1385 = vmul.f32 %v1384, 1.442695
    %v1386 = vpow.pop %v1385
    %v1387 = vadd.f32 %v1386, 1.0
    %v1388 = vrcp.pop %v1387
    %v1389 = vmul.f32 %v1387, %v1388
    %v1390 = vsub.f32 1.0, %v1389
    %v1391 = vmul.f32 %v1388, %v1390
    %v1392 = vadd.f32 %v1388, %v1391
    %vm1393 = vweird.f32 %v1387
    %vm1394 = vweird.f32 %v1388
    %vm1395 = vmor %vm1393, %vm1394
    %v1396 = vsel %vm1395, %v1388, %v1392
    %v1397 = vand.u32 2147483647, %v1387
    %vm1398 = vcmp.eq.f32.partialorder %v1397, 8.507059e+37
    %v1399 = vand.u32 %v1387, 2147483648
    %v1400 = vor.u32 1.1754944e-38, %v1399
    %v1401 = vsel %vm1398, %v1400, %v1396
    %v1402 = vmul.f32 1.0, %v1401
    %v1403 = vsel %vm1163, %v1383, %v1402
    %1404 = vrot.lane.b32.xlu0 %v1403, 64
    %v1405 = vpop.permute.xlu0 %1404
    %v1406 = vmul.f32 %v1403, %v1405
    %v1407 = vmul.f32 %v1403, %v1358
    %1409 = vrot.lane.b32.xlu0 %v1406, 96
    %v1410 = vpop.permute.xlu0 %1409
    %v1412 = vadd.f32 %v1407, %v1410
    %v1413 = vtanh.pop %v1412
    %v1414 = vmul.f32 %v1405, %v1413
    %v1415 = vsel %vm1226, %v1414, %v1357
    %v1416 = vsel %vm1226, %v1412, %v1358
    %v1418 = vsel %vm1242, %v1415, 0
    %1420 = vmatpush.msra.mxu0 0.0
    %1421 = vmatpush.msra.mxu0 0.0
    %1422 = vmatpush.msra.mxu0 0.0
    %1423 = vmatpush.msra.mxu0 0.0
    %1424 = vmatpush.msra.mxu0 0.0
    %1425 = vmatpush.msra.mxu0 0.0
    %1426 = vmatpush.msra.mxu0 0.0
    %1427 = vmatpush.msra.mxu0 0.0
    %1428 = vmatpush.msra.mxu0 0.0
    %1429 = vmatpush.msra.mxu0 0.0
    %1430 = vmatpush.msra.mxu0 0.0
    %1431 = vmatpush.msra.mxu0 0.0
    %1432 = vmatpush.msra.mxu0 %v1239
    %1433 = vmatpush.msra.mxu0 %v1238
    %1434 = vmatpush.msra.mxu0 %v1237
    %1435 = vmatpush.msra.mxu0 %v1236
    %1436 = vmatmul.f32.gmra.mxu0 %v1418
    %v1437 = vpop.f32.mrf.mxu0
    %v1438 = vadd.f32 0.0, %v1437
    %1439 = vdwg.mxu0
    %v1440 = vadd.f32 %v1227, %v1438
    %v1441 = vtanh.pop %v1440
    %v1442 = vxor.u32 %v1440, 2147483648
    %v1443 = vmul.f32 %v1442, 1.442695
    %v1444 = vpow.pop %v1443
    %v1445 = vadd.f32 %v1444, 1.0
    %v1446 = vrcp.pop %v1445
    %v1447 = vmul.f32 %v1445, %v1446
    %v1448 = vsub.f32 1.0, %v1447
    %v1449 = vmul.f32 %v1446, %v1448
    %v1450 = vadd.f32 %v1446, %v1449
    %vm1451 = vweird.f32 %v1445
    %vm1452 = vweird.f32 %v1446
    %vm1453 = vmor %vm1451, %vm1452
    %v1454 = vsel %vm1453, %v1446, %v1450
    %v1455 = vand.u32 2147483647, %v1445
    %vm1456 = vcmp.eq.f32.partialorder %v1455, 8.507059e+37
    %v1457 = vand.u32 %v1445, 2147483648
    %v1458 = vor.u32 1.1754944e-38, %v1457
    %v1459 = vsel %vm1456, %v1458, %v1454
    %v1460 = vmul.f32 1.0, %v1459
    %v1461 = vsel %vm1163, %v1441, %v1460
    %1462 = vrot.lane.b32.xlu0 %v1461, 64
    %v1463 = vpop.permute.xlu0 %1462
    %v1464 = vmul.f32 %v1461, %v1463
    %v1465 = vmul.f32 %v1461, %v1416
    %1467 = vrot.lane.b32.xlu0 %v1464, 96
    %v1468 = vpop.permute.xlu0 %1467
    %v1470 = vadd.f32 %v1465, %v1468
    %v1471 = vtanh.pop %v1470
    %v1472 = vmul.f32 %v1463, %v1471
    %v1473 = vsel %vm1229, %v1472, %v1415
    %v1474 = vsel %vm1229, %v1470, %v1416
    %v1476 = vsel %vm1242, %v1473, 0
    %1478 = vmatpush.msra.mxu0 0.0
    %1479 = vmatpush.msra.mxu0 0.0
    %1480 = vmatpush.msra.mxu0 0.0
    %1481 = vmatpush.msra.mxu0 0.0
    %1482 = vmatpush.msra.mxu0 0.0
    %1483 = vmatpush.msra.mxu0 0.0
    %1484 = vmatpush.msra.mxu0 0.0
    %1485 = vmatpush.msra.mxu0 0.0
    %1486 = vmatpush.msra.mxu0 0.0
    %1487 = vmatpush.msra.mxu0 0.0
    %1488 = vmatpush.msra.mxu0 0.0
    %1489 = vmatpush.msra.mxu0 0.0
    %1490 = vmatpush.msra.mxu0 %v1239
    %1491 = vmatpush.msra.mxu0 %v1238
    %1492 = vmatpush.msra.mxu0 %v1237
    %1493 = vmatpush.msra.mxu0 %v1236
    %1494 = vmatmul.f32.gmra.mxu0 %v1476
    %v1495 = vpop.f32.mrf.mxu0
    %v1496 = vadd.f32 0.0, %v1495
    %1497 = vdwg.mxu0
    %v1498 = vadd.f32 %v1230, %v1496
    %v1499 = vtanh.pop %v1498
    %v1500 = vxor.u32 %v1498, 2147483648
    %v1501 = vmul.f32 %v1500, 1.442695
    %v1502 = vpow.pop %v1501
    %v1503 = vadd.f32 %v1502, 1.0
    %v1504 = vrcp.pop %v1503
    %v1505 = vmul.f32 %v1503, %v1504
    %v1506 = vsub.f32 1.0, %v1505
    %v1507 = vmul.f32 %v1504, %v1506
    %v1508 = vadd.f32 %v1504, %v1507
    %vm1509 = vweird.f32 %v1503
    %vm1510 = vweird.f32 %v1504
    %vm1511 = vmor %vm1509, %vm1510
    %v1512 = vsel %vm1511, %v1504, %v1508
    %v1513 = vand.u32 2147483647, %v1503
    %vm1514 = vcmp.eq.f32.partialorder %v1513, 8.507059e+37
    %v1515 = vand.u32 %v1503, 2147483648
    %v1516 = vor.u32 1.1754944e-38, %v1515
    %v1517 = vsel %vm1514, %v1516, %v1512
    %v1518 = vmul.f32 1.0, %v1517
    %v1519 = vsel %vm1163, %v1499, %v1518
    %1520 = vrot.lane.b32.xlu0 %v1519, 64
    %v1521 = vpop.permute.xlu0 %1520
    %v1522 = vmul.f32 %v1519, %v1521
    %v1523 = vmul.f32 %v1519, %v1474
    %1525 = vrot.lane.b32.xlu0 %v1522, 96
    %v1526 = vpop.permute.xlu0 %1525
    %v1528 = vadd.f32 %v1523, %v1526
    %v1529 = vtanh.pop %v1528
    %v1530 = vmul.f32 %v1521, %v1529
    %v1531 = vsel %vm1232, %v1530, %v1473
    %v1532 = vsel %vm1232, %v1528, %v1474
    %v1534 = vsel %vm1242, %v1531, 0
    %1536 = vmatpush.msra.mxu0 0.0
    %1537 = vmatpush.msra.mxu0 0.0
    %1538 = vmatpush.msra.mxu0 0.0
    %1539 = vmatpush.msra.mxu0 0.0
    %1540 = vmatpush.msra.mxu0 0.0
    %1541 = vmatpush.msra.mxu0 0.0
    %1542 = vmatpush.msra.mxu0 0.0
    %1543 = vmatpush.msra.mxu0 0.0
    %1544 = vmatpush.msra.mxu0 0.0
    %1545 = vmatpush.msra.mxu0 0.0
    %1546 = vmatpush.msra.mxu0 0.0
    %1547 = vmatpush.msra.mxu0 0.0
    %1548 = vmatpush.msra.mxu0 %v1239
    %1549 = vmatpush.msra.mxu0 %v1238
    %1550 = vmatpush.msra.mxu0 %v1237
    %1551 = vmatpush.msra.mxu0 %v1236
    %1552 = vmatmul.f32.gmra.mxu0 %v1534
    %v1553 = vpop.f32.mrf.mxu0
    %v1554 = vadd.f32 0.0, %v1553
    %1555 = vdwg.mxu0
    %v1556 = vadd.f32 %v1233, %v1554
    %v1557 = vtanh.pop %v1556
    %v1558 = vxor.u32 %v1556, 2147483648
    %v1559 = vmul.f32 %v1558, 1.442695
    %v1560 = vpow.pop %v1559
    %v1561 = vadd.f32 %v1560, 1.0
    %v1562 = vrcp.pop %v1561
    %v1563 = vmul.f32 %v1561, %v1562
    %v1564 = vsub.f32 1.0, %v1563
    %v1565 = vmul.f32 %v1562, %v1564
    %v1566 = vadd.f32 %v1562, %v1565
    %vm1567 = vweird.f32 %v1561
    %vm1568 = vweird.f32 %v1562
    %vm1569 = vmor %vm1567, %vm1568
    %v1570 = vsel %vm1569, %v1562, %v1566
    %v1571 = vand.u32 2147483647, %v1561
    %vm1572 = vcmp.eq.f32.partialorder %v1571, 8.507059e+37
    %v1573 = vand.u32 %v1561, 2147483648
    %v1574 = vor.u32 1.1754944e-38, %v1573
    %v1575 = vsel %vm1572, %v1574, %v1570
    %v1576 = vmul.f32 1.0, %v1575
    %v1577 = vsel %vm1163, %v1557, %v1576
    %1578 = vrot.lane.b32.xlu0 %v1577, 64
    %v1579 = vpop.permute.xlu0 %1578
    %v1580 = vmul.f32 %v1577, %v1579
    %v1581 = vmul.f32 %v1577, %v1532
    %1583 = vrot.lane.b32.xlu0 %v1580, 96
    %v1584 = vpop.permute.xlu0 %1583
    %v1586 = vadd.f32 %v1581, %v1584
    %v1587 = vtanh.pop %v1586
    %v1588 = vmul.f32 %v1579, %v1587
    %v1589 = vsel %vm1235, %v1588, %v1531
    %v1590 = vld [vmem:[%s7] sm:$0xff]
    %v1591 = vld [vmem:[%s7 + $0x8] sm:$0xff]
    %v1592 = vld [vmem:[%s7 + $0x10] sm:$0xff]
    %v1593 = vld [vmem:[%s7 + $0x18] sm:$0xff]
    %v1594 = vld [vmem:[#allocation2] sm:$0x1]
    %v1596 = vperm.slane %v1594, 0
    %v1599 = vsel %vm1242, %v1589, 0
    %1601 = vmatpush.msra.mxu0 0.0
    %1602 = vmatpush.msra.mxu0 0.0
    %1603 = vmatpush.msra.mxu0 0.0
    %1604 = vmatpush.msra.mxu0 0.0
    %1605 = vmatpush.msra.mxu0 0.0
    %1606 = vmatpush.msra.mxu0 0.0
    %1607 = vmatpush.msra.mxu0 0.0
    %1608 = vmatpush.msra.mxu0 0.0
    %1609 = vmatpush.msra.mxu0 0.0
    %1610 = vmatpush.msra.mxu0 0.0
    %1611 = vmatpush.msra.mxu0 0.0
    %1612 = vmatpush.msra.mxu0 0.0
    %1613 = vmatpush.msra.mxu0 %v1593
    %1614 = vmatpush.msra.mxu0 %v1592
    %1615 = vmatpush.msra.mxu0 %v1591
    %1616 = vmatpush.msra.mxu0 %v1590
    %1617 = vmatmul.f32.gmra.mxu0 %v1599
    %v1618 = vpop.f32.mrf.mxu0
    %v1619 = vadd.f32 %v1596, %v1618
    %1620 = vdwg.mxu0
    %v1621 = vxor.u32 %v1619, 2147483648
    %v1622 = vmul.f32 %v1621, 1.442695
    %v1623 = vpow.pop %v1622
    %v1624 = vadd.f32 %v1623, 1.0
    %v1625 = vrcp.pop %v1624
    %v1626 = vmul.f32 %v1624, %v1625
    %v1627 = vsub.f32 1.0, %v1626
    %v1628 = vmul.f32 %v1625, %v1627
    %v1629 = vadd.f32 %v1625, %v1628
    %vm1630 = vweird.f32 %v1624
    %vm1631 = vweird.f32 %v1625
    %vm1632 = vmor %vm1630, %vm1631
    %v1633 = vsel %vm1632, %v1625, %v1629
    %v1634 = vand.u32 2147483647, %v1624
    %vm1635 = vcmp.eq.f32.partialorder %v1634, 8.507059e+37
    %v1636 = vand.u32 %v1624, 2147483648
    %v1637 = vor.u32 1.1754944e-38, %v1636
    %v1638 = vsel %vm1635, %v1637, %v1633
    %v1639 = vmul.f32 1.0, %v1638
    %vm1640 = vcmask 7168
    %1641 = vst.msk [vmem:[%s9] sm:$0xff] %vm1640, %v1639
    // Predicated region
    $region42: #{avg_forward.1} parent=1 // pred_check
      _
    $region43: #{avg_forward.1} parent=1 // pred_check_branch
      %1643 = sbr.rel (0) target = $region45
    $region44: #{avg_forward.1} parent=1 // pred_region
      _
    $region45: #{avg_forward.1} parent=1 // pred_fallthru
      _
    // Predicated region
    $region46: #{avg_forward.1} parent=1 // pred_check
      _
    $region47: #{avg_forward.1} parent=1 // pred_check_branch
      %1645 = sbr.rel (0) target = $region49
    $region48: #{avg_forward.1} parent=1 // pred_region
      _
    $region49: #{avg_forward.1} parent=1 // pred_fallthru
      _
    %1646 = vsyncpa [#allocation4], 1

</llo_original>
